<compile_context>
chip_gen: v7x
topology: tpu7x:2x2x1
jax: 0.10.0
libtpu: 0.0.40
codegen_flags: <defaults>
</compile_context>

<pallas_src>
import functools

import jax
import jax.numpy as jnp
from jax.experimental import pallas as pl
from jax.experimental.pallas import tpu as pltpu

# Reference parameter storage order is (i, f, g, o); the kernel packs gates as
# (i, f, o, g) so one sigmoid covers lanes [0, 3H) and one tanh covers [3H, 4H).
GATE_ORDER = (0, 1, 3, 2)


# ----------------------------------------------------------------------------
# Pallas kernel: 2-layer LSTM over time (fully unrolled) + tanh + fused heads
# ----------------------------------------------------------------------------
def _make_kernel(T, H, A):
    H4 = 4 * H

    def kernel(x_ref, wih1_ref, b1_ref, wrec_ref, wih2_ref, b2_ref,
               wh_ref, bh_ref, out_ref):
        B = x_ref.shape[0]
        I = x_ref.shape[2]

        # Hoisted layer-1 input projection: one (B*T, I) x (I, 4H) dot, bias
        # folded in.  Reshapes are sublane-aligned (T == 8) -> no-op relayouts.
        xflat = x_ref[...].reshape(B * T, I)
        xproj = (jnp.dot(xflat, wih1_ref[...], preferred_element_type=jnp.float32)
                 + b1_ref[...])
        xproj = xproj.reshape(B, T, H4)

        wrec = wrec_ref[...]                                  # (2H, 8H) block-diag
        wih2 = wih2_ref[...]                                  # (H, 4H)
        b2b = jnp.broadcast_to(b2_ref[...], (B, H4))          # hoisted broadcast

        # Gate order (i, f, o, g): sigmoid on lanes [0,3H), tanh on [3H,4H).
        lane = jax.lax.broadcasted_iota(jnp.int32, (B, H4), 1)
        sig_mask = lane < 3 * H

        def activate(gates):
            a = jnp.where(sig_mask, jax.nn.sigmoid(gates), jnp.tanh(gates))
            # 32-lane sub-vreg extracts; unavoidable without heavier roll
            # tricks since the recurrent concat needs compact (B, H) state.
            return a[:, 0:H], a[:, H:2 * H], a[:, 2 * H:3 * H], a[:, 3 * H:H4]

        def lstm_cell(gates, c_prev):
            i_g, f_g, o_g, g_g = activate(gates)
            c_new = f_g * c_prev + i_g * g_g
            h_new = o_g * jnp.tanh(c_new)
            return h_new, c_new

        z = jnp.zeros((B, H), jnp.float32)

        # t = 0: states are zero -> skip the recurrent matmul entirely.
        h1, c1 = lstm_cell(xproj[:, 0, :], z)
        h2, c2 = lstm_cell(
            jnp.dot(h1, wih2, preferred_element_type=jnp.float32) + b2b, z)

        # Fully unrolled recurrence: 2 serial MXU dots per timestep.
        for t in range(1, T):
            rec = jnp.dot(jnp.concatenate([h1, h2], axis=1), wrec,
                          preferred_element_type=jnp.float32)  # (B, 8H)
            h1, c1 = lstm_cell(xproj[:, t, :] + rec[:, 0:H4], c1)
            h2, c2 = lstm_cell(
                jnp.dot(h1, wih2, preferred_element_type=jnp.float32)
                + rec[:, H4:2 * H4] + b2b, c2)

        xt = jnp.tanh(h2)                                      # tanh(x[:, -1, :])
        # Fused heads: [ V | mu | L_flat | zero-pad ] -> one dot, one 128-lane
        # lane-dense store; sigmoid only on the mu lanes.
        head = (jnp.dot(xt, wh_ref[...], preferred_element_type=jnp.float32)
                + bh_ref[...])
        lane_o = jax.lax.broadcasted_iota(jnp.int32, head.shape, 1)
        mu_lanes = (lane_o >= 1) & (lane_o < 1 + A)
        out_ref[...] = jnp.where(mu_lanes, jax.nn.sigmoid(head), head)

    return kernel


def lstm_naf_heads(x, fp, action_space):
    """x: (B, T, I) batch-first.  Returns V:(B,1), mu:(B,A), Lflat:(B,A*A)."""
    B, T, _ = x.shape
    H = fp["wih2"].shape[0]
    A = action_space
    out_dim = 1 + A + A * A
    out_pad = fp["wh"].shape[1]

    kernel = _make_kernel(T, H, A)

    def vmem():
        return pl.BlockSpec(memory_space=pltpu.MemorySpace.VMEM)

    packed = pl.pallas_call(
        kernel,
        out_shape=jax.ShapeDtypeStruct((B, out_pad), jnp.float32),
        in_specs=[vmem() for _ in range(8)],
        out_specs=vmem(),
    )(x,
      fp["wih1"], fp["b1"], fp["wrec"],
      fp["wih2"], fp["b2"],
      fp["wh"], fp["bh"])

    V = packed[:, 0:1]
    mu = packed[:, 1:1 + A]
    Lflat = packed[:, 1 + A:out_dim]
    return V, mu, Lflat


# ----------------------------------------------------------------------------
# Full Policy.forward (mu, Q, V) — tiny NAF quadratic stays in plain JAX,
# fused with the kernel under one jit.
# ----------------------------------------------------------------------------
@functools.partial(jax.jit, static_argnames=("action_space",))
def policy_forward(fp, x, u, *, action_space):
    """x: (B, T, I) batch-first (PyTorch convention); u: (B, 1, A) or None."""
    V_k, mu_k, Lflat = lstm_naf_heads(x, fp, action_space)
    B = mu_k.shape[0]
    A = action_space
    mu = mu_k[None]                                      # (1, B, A), like unsqueeze(0)
    V = V_k[None]                                        # (1, B, 1)
    Q = None
    if u is not None:
        # TODO(synk): NAF quadratic tail (tiny 4x4 bmms) kept in plain JAX
        # under this jit; folding it into the kernel epilogue is possible but
        # batched 3-D dots at (2,4,4) risk awkward Mosaic layouts for ~zero
        # compute.
        L = Lflat.reshape(B, A, A)
        tril_mask = jnp.tril(jnp.ones((A, A), jnp.float32), k=-1)[None]
        diag_mask = jnp.eye(A, dtype=jnp.float32)[None]
        L = L * tril_mask + jnp.exp(L) * diag_mask
        P = jnp.einsum("bij,bkj->bik", L, L)             # bmm(L, L.transpose(2,1))
        # NOTE: (B,1,A) - (1,B,A) -> (B,B,A) faithfully reproduces the PyTorch
        # broadcast (u - mu with mu unsqueezed), giving cross-batch Q (1,B,B).
        u_mu = u - mu
        t1 = jnp.einsum("bij,bjk->bik", u_mu, P)         # bmm(u_mu, P)
        t2 = jnp.einsum("bij,bkj->bik", t1, u_mu)        # bmm(t1, u_mu.transpose(2,1))
        Amat = -0.5 * t2[:, :, 0]                        # (B, B)
        Q = Amat + V                                     # broadcast -> (1, B, B)
    return mu, Q, V


# ----------------------------------------------------------------------------
# Parameter construction: per-gate weights (reference layout) + packing for
# the fused kernel layout.
# ----------------------------------------------------------------------------
def init_params(key, num_inputs, hidden, action_space, scale=0.1):
    I, H, A = num_inputs, hidden, action_space
    ks = jax.random.split(key, 12)

    def w(k, shape):
        return (scale * jax.random.normal(k, shape)).astype(jnp.float32)

    return dict(
        wih1=w(ks[0], (4, I, H)), whh1=w(ks[1], (4, H, H)), b1=w(ks[2], (4, 1, H)),
        wih2=w(ks[3], (4, H, H)), whh2=w(ks[4], (4, H, H)), b2=w(ks[5], (4, 1, H)),
        wv=w(ks[6], (H, 1)), bv=w(ks[7], (1, 1)),
        wmu=w(ks[8], (H, A)), bmu=w(ks[9], (1, A)),
        wl=w(ks[10], (H, A * A)), bl=w(ks[11], (1, A * A)),
    )


def pack_params(p, action_space):
    """Pack per-gate weights into the fused kernel layout:
       wih*/b*: (in, 4H) in (i,f,o,g) gate order,
       wrec:    (2H, 8H) block-diagonal of (whh1, whh2),
       wh/bh:   heads [V | mu | L] padded to 128 lanes."""
    A = action_space

    def cat_gates(arr):                                  # (4, in, H) -> (in, 4H)
        return jnp.concatenate([arr[k] for k in GATE_ORDER], axis=1)

    whh1 = cat_gates(p["whh1"])                          # (H, 4H)
    whh2 = cat_gates(p["whh2"])                          # (H, 4H)
    z = jnp.zeros_like(whh1)
    wrec = jnp.concatenate(
        [jnp.concatenate([whh1, z], axis=1),
         jnp.concatenate([z, whh2], axis=1)], axis=0)    # (2H, 8H) block-diag

    out_dim = 1 + A + A * A
    out_pad = ((out_dim + 127) // 128) * 128
    wh = jnp.concatenate([p["wv"], p["wmu"], p["wl"]], axis=1)   # (H, out_dim)
    bh = jnp.concatenate([p["bv"], p["bmu"], p["bl"]], axis=1)   # (1, out_dim)
    wh = jnp.pad(wh, ((0, 0), (0, out_pad - out_dim)))
    bh = jnp.pad(bh, ((0, 0), (0, out_pad - out_dim)))

    return dict(
        wih1=cat_gates(p["wih1"]), b1=cat_gates(p["b1"]),
        wrec=wrec,
        wih2=cat_gates(p["wih2"]), b2=cat_gates(p["b2"]),
        wh=wh, bh=bh,
    )


# ----------------------------------------------------------------------------
# Pure-JAX reference (un-fused parameters) for a correctness check.
# Dots use HIGHEST precision so the reference is trustworthy f32.
# ----------------------------------------------------------------------------
def _ref_lstm_heads(x, p):
    B, T, _ = x.shape
    H = p["whh1"].shape[-1]
    hdot = lambda a, b: jnp.dot(a, b, precision=jax.lax.Precision.HIGHEST)

    h1 = jnp.zeros((B, H), jnp.float32); c1 = jnp.zeros((B, H), jnp.float32)
    h2 = jnp.zeros((B, H), jnp.float32); c2 = jnp.zeros((B, H), jnp.float32)

    def cell(x_in, h, c, wih, whh, b):
        g = [hdot(x_in, wih[k]) + hdot(h, whh[k]) + b[k] for k in range(4)]
        i_g, f_g = jax.nn.sigmoid(g[0]), jax.nn.sigmoid(g[1])
        g_g, o_g = jnp.tanh(g[2]), jax.nn.sigmoid(g[3])
        c = f_g * c + i_g * g_g
        h = o_g * jnp.tanh(c)
        return h, c

    for t in range(T):
        h1, c1 = cell(x[:, t, :], h1, c1, p["wih1"], p["whh1"], p["b1"])
        h2, c2 = cell(h1, h2, c2, p["wih2"], p["whh2"], p["b2"])
    xt = jnp.tanh(h2)
    V = hdot(xt, p["wv"]) + p["bv"]
    mu = jax.nn.sigmoid(hdot(xt, p["wmu"]) + p["bmu"])
    Lf = hdot(xt, p["wl"]) + p["bl"]
    return V, mu, Lf


if __name__ == "__main__":
    B, T, NUM_INPUTS, HIDDEN, ACTION = 2, 8, 6, 32, 4

    key = jax.random.PRNGKey(0)
    kp, kx, ku = jax.random.split(key, 3)
    params = init_params(kp, NUM_INPUTS, HIDDEN, ACTION)
    fused = pack_params(params, ACTION)

    x = jax.random.normal(kx, (B, T, NUM_INPUTS), dtype=jnp.float32)  # batch-first
    u = jax.random.normal(ku, (B, 1, ACTION), dtype=jnp.float32)

    mu, Q, V = policy_forward(fused, x, u, action_space=ACTION)
    jax.block_until_ready((mu, Q, V))

    assert mu.shape == (1, B, ACTION)
    assert V.shape == (1, B, 1)
    assert Q.shape == (1, B, B)

    # Correctness check of the Pallas kernel against a pure-JAX reference.
    # Tolerance tightened 50x from the previous 5e-3 (review); the remaining
    # margin covers EUP-vs-XLA transcendental implementation differences, not
    # gate-packing/slicing bugs (those produce O(1e-2)+ errors).
    V_k, mu_k, Lf_k = lstm_naf_heads(x, fused, ACTION)
    V_r, mu_r, Lf_r = _ref_lstm_heads(x, params)
    assert bool(jnp.allclose(V_k, V_r, atol=1e-4, rtol=1e-4))
    assert bool(jnp.allclose(mu_k, mu_r, atol=1e-4, rtol=1e-4))
    assert bool(jnp.allclose(Lf_k, Lf_r, atol=1e-4, rtol=1e-4))

    print("KERNEL_OK")
</pallas_src>

<mosaic_0001>
module attributes {stable_mosaic.version = 11 : i64} {
  func.func @kernel(%arg0: memref<2x8x6xf32, #tpu.memory_space<vmem>>, %arg1: memref<6x128xf32, #tpu.memory_space<vmem>>, %arg2: memref<1x128xf32, #tpu.memory_space<vmem>>, %arg3: memref<64x256xf32, #tpu.memory_space<vmem>>, %arg4: memref<32x128xf32, #tpu.memory_space<vmem>>, %arg5: memref<1x128xf32, #tpu.memory_space<vmem>>, %arg6: memref<32x128xf32, #tpu.memory_space<vmem>>, %arg7: memref<1x128xf32, #tpu.memory_space<vmem>>, %arg8: memref<2x128xf32, #tpu.memory_space<vmem>>) attributes {dimension_semantics = [], scalar_prefetch = 0 : i64, scratch_operands = 0 : i64, tpu.core_type = #tpu.core_type<tc>} {
    %c0 = arith.constant 0 : index
    %c0_0 = arith.constant 0 : index
    %c0_1 = arith.constant 0 : index
    %0 = vector.load %arg0[%c0, %c0_0, %c0_1] : memref<2x8x6xf32, #tpu.memory_space<vmem>>, vector<2x8x6xf32>
    %1 = vector.shape_cast %0 : vector<2x8x6xf32> to vector<16x6xf32>
    %c0_2 = arith.constant 0 : index
    %c0_3 = arith.constant 0 : index
    %2 = vector.load %arg1[%c0_2, %c0_3] : memref<6x128xf32, #tpu.memory_space<vmem>>, vector<6x128xf32>
    %cst = arith.constant dense<0.000000e+00> : vector<16x128xf32>
    %3 = tpu.matmul %1, %2, %cst {dimension_numbers = #tpu.dot_dimension_numbers<[1], [0], [0], [1], [0, 0, 1, 1], [], []>} : vector<16x6xf32>, vector<6x128xf32>, vector<16x128xf32> -> vector<16x128xf32>
    %c0_4 = arith.constant 0 : index
    %c0_5 = arith.constant 0 : index
    %4 = vector.load %arg2[%c0_4, %c0_5] : memref<1x128xf32, #tpu.memory_space<vmem>>, vector<1x128xf32>
    %5 = vector.broadcast %4 : vector<1x128xf32> to vector<16x128xf32>
    %6 = arith.addf %3, %5 : vector<16x128xf32>
    %7 = vector.shape_cast %6 : vector<16x128xf32> to vector<2x8x128xf32>
    %c0_6 = arith.constant 0 : index
    %c0_7 = arith.constant 0 : index
    %8 = vector.load %arg3[%c0_6, %c0_7] : memref<64x256xf32, #tpu.memory_space<vmem>>, vector<64x256xf32>
    %c0_8 = arith.constant 0 : index
    %c0_9 = arith.constant 0 : index
    %9 = vector.load %arg4[%c0_8, %c0_9] : memref<32x128xf32, #tpu.memory_space<vmem>>, vector<32x128xf32>
    %c0_10 = arith.constant 0 : index
    %c0_11 = arith.constant 0 : index
    %10 = vector.load %arg5[%c0_10, %c0_11] : memref<1x128xf32, #tpu.memory_space<vmem>>, vector<1x128xf32>
    %11 = vector.shape_cast %10 : vector<1x128xf32> to vector<1x128xf32>
    %12 = vector.broadcast %11 : vector<1x128xf32> to vector<2x128xf32>
    %13 = tpu.iota {dimensions = array<i32: 1>} : vector<2x128xi32>
    %c96_i32 = arith.constant 96 : i32
    %14 = vector.broadcast %c96_i32 : i32 to vector<2x128xi32>
    %15 = arith.cmpi slt, %13, %14 : vector<2x128xi32>
    %cst_12 = arith.constant 0.000000e+00 : f32
    %16 = vector.broadcast %cst_12 : f32 to vector<2x32xf32>
    %17 = vector.extract_strided_slice %7 {offsets = [0, 0, 0], sizes = [2, 1, 128], strides = [1, 1, 1]} : vector<2x8x128xf32> to vector<2x1x128xf32>
    %18 = vector.shape_cast %17 : vector<2x1x128xf32> to vector<2x128xf32>
    %19 = arith.negf %18 : vector<2x128xf32>
    %20 = math.exp %19 : vector<2x128xf32>
    %cst_13 = arith.constant 1.000000e+00 : f32
    %21 = vector.broadcast %cst_13 : f32 to vector<2x128xf32>
    %22 = arith.addf %21, %20 : vector<2x128xf32>
    %23 = arith.divf %21, %22 : vector<2x128xf32>
    %24 = math.tanh %18 : vector<2x128xf32>
    %25 = arith.select %15, %23, %24 : vector<2x128xi1>, vector<2x128xf32>
    %26 = vector.extract_strided_slice %25 {offsets = [0, 0], sizes = [2, 32], strides = [1, 1]} : vector<2x128xf32> to vector<2x32xf32>
    %27 = vector.extract_strided_slice %25 {offsets = [0, 32], sizes = [2, 32], strides = [1, 1]} : vector<2x128xf32> to vector<2x32xf32>
    %28 = vector.extract_strided_slice %25 {offsets = [0, 64], sizes = [2, 32], strides = [1, 1]} : vector<2x128xf32> to vector<2x32xf32>
    %29 = vector.extract_strided_slice %25 {offsets = [0, 96], sizes = [2, 32], strides = [1, 1]} : vector<2x128xf32> to vector<2x32xf32>
    %30 = arith.mulf %27, %16 : vector<2x32xf32>
    %31 = arith.mulf %26, %29 : vector<2x32xf32>
    %32 = arith.addf %30, %31 : vector<2x32xf32>
    %33 = math.tanh %32 : vector<2x32xf32>
    %34 = arith.mulf %28, %33 : vector<2x32xf32>
    %cst_14 = arith.constant dense<0.000000e+00> : vector<2x128xf32>
    %35 = tpu.matmul %34, %9, %cst_14 {dimension_numbers = #tpu.dot_dimension_numbers<[1], [0], [0], [1], [0, 0, 1, 1], [], []>} : vector<2x32xf32>, vector<32x128xf32>, vector<2x128xf32> -> vector<2x128xf32>
    %36 = arith.addf %35, %12 : vector<2x128xf32>
    %37 = arith.negf %36 : vector<2x128xf32>
    %38 = math.exp %37 : vector<2x128xf32>
    %cst_15 = arith.constant 1.000000e+00 : f32
    %39 = vector.broadcast %cst_15 : f32 to vector<2x128xf32>
    %40 = arith.addf %39, %38 : vector<2x128xf32>
    %41 = arith.divf %39, %40 : vector<2x128xf32>
    %42 = math.tanh %36 : vector<2x128xf32>
    %43 = arith.select %15, %41, %42 : vector<2x128xi1>, vector<2x128xf32>
    %44 = vector.extract_strided_slice %43 {offsets = [0, 0], sizes = [2, 32], strides = [1, 1]} : vector<2x128xf32> to vector<2x32xf32>
    %45 = vector.extract_strided_slice %43 {offsets = [0, 32], sizes = [2, 32], strides = [1, 1]} : vector<2x128xf32> to vector<2x32xf32>
    %46 = vector.extract_strided_slice %43 {offsets = [0, 64], sizes = [2, 32], strides = [1, 1]} : vector<2x128xf32> to vector<2x32xf32>
    %47 = vector.extract_strided_slice %43 {offsets = [0, 96], sizes = [2, 32], strides = [1, 1]} : vector<2x128xf32> to vector<2x32xf32>
    %48 = arith.mulf %45, %16 : vector<2x32xf32>
    %49 = arith.mulf %44, %47 : vector<2x32xf32>
    %50 = arith.addf %48, %49 : vector<2x32xf32>
    %51 = math.tanh %50 : vector<2x32xf32>
    %52 = arith.mulf %46, %51 : vector<2x32xf32>
    %53 = tpu.concatenate %34, %52 in 1 : vector<2x32xf32>, vector<2x32xf32> -> vector<2x64xf32>
    %cst_16 = arith.constant dense<0.000000e+00> : vector<2x256xf32>
    %54 = tpu.matmul %53, %8, %cst_16 {dimension_numbers = #tpu.dot_dimension_numbers<[1], [0], [0], [1], [0, 0, 1, 1], [], []>} : vector<2x64xf32>, vector<64x256xf32>, vector<2x256xf32> -> vector<2x256xf32>
    %55 = vector.extract_strided_slice %7 {offsets = [0, 1, 0], sizes = [2, 1, 128], strides = [1, 1, 1]} : vector<2x8x128xf32> to vector<2x1x128xf32>
    %56 = vector.shape_cast %55 : vector<2x1x128xf32> to vector<2x128xf32>
    %57 = vector.extract_strided_slice %54 {offsets = [0, 0], sizes = [2, 128], strides = [1, 1]} : vector<2x256xf32> to vector<2x128xf32>
    %58 = arith.addf %56, %57 : vector<2x128xf32>
    %59 = arith.negf %58 : vector<2x128xf32>
    %60 = math.exp %59 : vector<2x128xf32>
    %cst_17 = arith.constant 1.000000e+00 : f32
    %61 = vector.broadcast %cst_17 : f32 to vector<2x128xf32>
    %62 = arith.addf %61, %60 : vector<2x128xf32>
    %63 = arith.divf %61, %62 : vector<2x128xf32>
    %64 = math.tanh %58 : vector<2x128xf32>
    %65 = arith.select %15, %63, %64 : vector<2x128xi1>, vector<2x128xf32>
    %66 = vector.extract_strided_slice %65 {offsets = [0, 0], sizes = [2, 32], strides = [1, 1]} : vector<2x128xf32> to vector<2x32xf32>
    %67 = vector.extract_strided_slice %65 {offsets = [0, 32], sizes = [2, 32], strides = [1, 1]} : vector<2x128xf32> to vector<2x32xf32>
    %68 = vector.extract_strided_slice %65 {offsets = [0, 64], sizes = [2, 32], strides = [1, 1]} : vector<2x128xf32> to vector<2x32xf32>
    %69 = vector.extract_strided_slice %65 {offsets = [0, 96], sizes = [2, 32], strides = [1, 1]} : vector<2x128xf32> to vector<2x32xf32>
    %70 = arith.mulf %67, %32 : vector<2x32xf32>
    %71 = arith.mulf %66, %69 : vector<2x32xf32>
    %72 = arith.addf %70, %71 : vector<2x32xf32>
    %73 = math.tanh %72 : vector<2x32xf32>
    %74 = arith.mulf %68, %73 : vector<2x32xf32>
    %cst_18 = arith.constant dense<0.000000e+00> : vector<2x128xf32>
    %75 = tpu.matmul %74, %9, %cst_18 {dimension_numbers = #tpu.dot_dimension_numbers<[1], [0], [0], [1], [0, 0, 1, 1], [], []>} : vector<2x32xf32>, vector<32x128xf32>, vector<2x128xf32> -> vector<2x128xf32>
    %76 = vector.extract_strided_slice %54 {offsets = [0, 128], sizes = [2, 128], strides = [1, 1]} : vector<2x256xf32> to vector<2x128xf32>
    %77 = arith.addf %75, %76 : vector<2x128xf32>
    %78 = arith.addf %77, %12 : vector<2x128xf32>
    %79 = arith.negf %78 : vector<2x128xf32>
    %80 = math.exp %79 : vector<2x128xf32>
    %cst_19 = arith.constant 1.000000e+00 : f32
    %81 = vector.broadcast %cst_19 : f32 to vector<2x128xf32>
    %82 = arith.addf %81, %80 : vector<2x128xf32>
    %83 = arith.divf %81, %82 : vector<2x128xf32>
    %84 = math.tanh %78 : vector<2x128xf32>
    %85 = arith.select %15, %83, %84 : vector<2x128xi1>, vector<2x128xf32>
    %86 = vector.extract_strided_slice %85 {offsets = [0, 0], sizes = [2, 32], strides = [1, 1]} : vector<2x128xf32> to vector<2x32xf32>
    %87 = vector.extract_strided_slice %85 {offsets = [0, 32], sizes = [2, 32], strides = [1, 1]} : vector<2x128xf32> to vector<2x32xf32>
    %88 = vector.extract_strided_slice %85 {offsets = [0, 64], sizes = [2, 32], strides = [1, 1]} : vector<2x128xf32> to vector<2x32xf32>
    %89 = vector.extract_strided_slice %85 {offsets = [0, 96], sizes = [2, 32], strides = [1, 1]} : vector<2x128xf32> to vector<2x32xf32>
    %90 = arith.mulf %87, %50 : vector<2x32xf32>
    %91 = arith.mulf %86, %89 : vector<2x32xf32>
    %92 = arith.addf %90, %91 : vector<2x32xf32>
    %93 = math.tanh %92 : vector<2x32xf32>
    %94 = arith.mulf %88, %93 : vector<2x32xf32>
    %95 = tpu.concatenate %74, %94 in 1 : vector<2x32xf32>, vector<2x32xf32> -> vector<2x64xf32>
    %cst_20 = arith.constant dense<0.000000e+00> : vector<2x256xf32>
    %96 = tpu.matmul %95, %8, %cst_20 {dimension_numbers = #tpu.dot_dimension_numbers<[1], [0], [0], [1], [0, 0, 1, 1], [], []>} : vector<2x64xf32>, vector<64x256xf32>, vector<2x256xf32> -> vector<2x256xf32>
    %97 = vector.extract_strided_slice %7 {offsets = [0, 2, 0], sizes = [2, 1, 128], strides = [1, 1, 1]} : vector<2x8x128xf32> to vector<2x1x128xf32>
    %98 = vector.shape_cast %97 : vector<2x1x128xf32> to vector<2x128xf32>
    %99 = vector.extract_strided_slice %96 {offsets = [0, 0], sizes = [2, 128], strides = [1, 1]} : vector<2x256xf32> to vector<2x128xf32>
    %100 = arith.addf %98, %99 : vector<2x128xf32>
    %101 = arith.negf %100 : vector<2x128xf32>
    %102 = math.exp %101 : vector<2x128xf32>
    %cst_21 = arith.constant 1.000000e+00 : f32
    %103 = vector.broadcast %cst_21 : f32 to vector<2x128xf32>
    %104 = arith.addf %103, %102 : vector<2x128xf32>
    %105 = arith.divf %103, %104 : vector<2x128xf32>
    %106 = math.tanh %100 : vector<2x128xf32>
    %107 = arith.select %15, %105, %106 : vector<2x128xi1>, vector<2x128xf32>
    %108 = vector.extract_strided_slice %107 {offsets = [0, 0], sizes = [2, 32], strides = [1, 1]} : vector<2x128xf32> to vector<2x32xf32>
    %109 = vector.extract_strided_slice %107 {offsets = [0, 32], sizes = [2, 32], strides = [1, 1]} : vector<2x128xf32> to vector<2x32xf32>
    %110 = vector.extract_strided_slice %107 {offsets = [0, 64], sizes = [2, 32], strides = [1, 1]} : vector<2x128xf32> to vector<2x32xf32>
    %111 = vector.extract_strided_slice %107 {offsets = [0, 96], sizes = [2, 32], strides = [1, 1]} : vector<2x128xf32> to vector<2x32xf32>
    %112 = arith.mulf %109, %72 : vector<2x32xf32>
    %113 = arith.mulf %108, %111 : vector<2x32xf32>
    %114 = arith.addf %112, %113 : vector<2x32xf32>
    %115 = math.tanh %114 : vector<2x32xf32>
    %116 = arith.mulf %110, %115 : vector<2x32xf32>
    %cst_22 = arith.constant dense<0.000000e+00> : vector<2x128xf32>
    %117 = tpu.matmul %116, %9, %cst_22 {dimension_numbers = #tpu.dot_dimension_numbers<[1], [0], [0], [1], [0, 0, 1, 1], [], []>} : vector<2x32xf32>, vector<32x128xf32>, vector<2x128xf32> -> vector<2x128xf32>
    %118 = vector.extract_strided_slice %96 {offsets = [0, 128], sizes = [2, 128], strides = [1, 1]} : vector<2x256xf32> to vector<2x128xf32>
    %119 = arith.addf %117, %118 : vector<2x128xf32>
    %120 = arith.addf %119, %12 : vector<2x128xf32>
    %121 = arith.negf %120 : vector<2x128xf32>
    %122 = math.exp %121 : vector<2x128xf32>
    %cst_23 = arith.constant 1.000000e+00 : f32
    %123 = vector.broadcast %cst_23 : f32 to vector<2x128xf32>
    %124 = arith.addf %123, %122 : vector<2x128xf32>
    %125 = arith.divf %123, %124 : vector<2x128xf32>
    %126 = math.tanh %120 : vector<2x128xf32>
    %127 = arith.select %15, %125, %126 : vector<2x128xi1>, vector<2x128xf32>
    %128 = vector.extract_strided_slice %127 {offsets = [0, 0], sizes = [2, 32], strides = [1, 1]} : vector<2x128xf32> to vector<2x32xf32>
    %129 = vector.extract_strided_slice %127 {offsets = [0, 32], sizes = [2, 32], strides = [1, 1]} : vector<2x128xf32> to vector<2x32xf32>
    %130 = vector.extract_strided_slice %127 {offsets = [0, 64], sizes = [2, 32], strides = [1, 1]} : vector<2x128xf32> to vector<2x32xf32>
    %131 = vector.extract_strided_slice %127 {offsets = [0, 96], sizes = [2, 32], strides = [1, 1]} : vector<2x128xf32> to vector<2x32xf32>
    %132 = arith.mulf %129, %92 : vector<2x32xf32>
    %133 = arith.mulf %128, %131 : vector<2x32xf32>
    %134 = arith.addf %132, %133 : vector<2x32xf32>
    %135 = math.tanh %134 : vector<2x32xf32>
    %136 = arith.mulf %130, %135 : vector<2x32xf32>
    %137 = tpu.concatenate %116, %136 in 1 : vector<2x32xf32>, vector<2x32xf32> -> vector<2x64xf32>
    %cst_24 = arith.constant dense<0.000000e+00> : vector<2x256xf32>
    %138 = tpu.matmul %137, %8, %cst_24 {dimension_numbers = #tpu.dot_dimension_numbers<[1], [0], [0], [1], [0, 0, 1, 1], [], []>} : vector<2x64xf32>, vector<64x256xf32>, vector<2x256xf32> -> vector<2x256xf32>
    %139 = vector.extract_strided_slice %7 {offsets = [0, 3, 0], sizes = [2, 1, 128], strides = [1, 1, 1]} : vector<2x8x128xf32> to vector<2x1x128xf32>
    %140 = vector.shape_cast %139 : vector<2x1x128xf32> to vector<2x128xf32>
    %141 = vector.extract_strided_slice %138 {offsets = [0, 0], sizes = [2, 128], strides = [1, 1]} : vector<2x256xf32> to vector<2x128xf32>
    %142 = arith.addf %140, %141 : vector<2x128xf32>
    %143 = arith.negf %142 : vector<2x128xf32>
    %144 = math.exp %143 : vector<2x128xf32>
    %cst_25 = arith.constant 1.000000e+00 : f32
    %145 = vector.broadcast %cst_25 : f32 to vector<2x128xf32>
    %146 = arith.addf %145, %144 : vector<2x128xf32>
    %147 = arith.divf %145, %146 : vector<2x128xf32>
    %148 = math.tanh %142 : vector<2x128xf32>
    %149 = arith.select %15, %147, %148 : vector<2x128xi1>, vector<2x128xf32>
    %150 = vector.extract_strided_slice %149 {offsets = [0, 0], sizes = [2, 32], strides = [1, 1]} : vector<2x128xf32> to vector<2x32xf32>
    %151 = vector.extract_strided_slice %149 {offsets = [0, 32], sizes = [2, 32], strides = [1, 1]} : vector<2x128xf32> to vector<2x32xf32>
    %152 = vector.extract_strided_slice %149 {offsets = [0, 64], sizes = [2, 32], strides = [1, 1]} : vector<2x128xf32> to vector<2x32xf32>
    %153 = vector.extract_strided_slice %149 {offsets = [0, 96], sizes = [2, 32], strides = [1, 1]} : vector<2x128xf32> to vector<2x32xf32>
    %154 = arith.mulf %151, %114 : vector<2x32xf32>
    %155 = arith.mulf %150, %153 : vector<2x32xf32>
    %156 = arith.addf %154, %155 : vector<2x32xf32>
    %157 = math.tanh %156 : vector<2x32xf32>
    %158 = arith.mulf %152, %157 : vector<2x32xf32>
    %cst_26 = arith.constant dense<0.000000e+00> : vector<2x128xf32>
    %159 = tpu.matmul %158, %9, %cst_26 {dimension_numbers = #tpu.dot_dimension_numbers<[1], [0], [0], [1], [0, 0, 1, 1], [], []>} : vector<2x32xf32>, vector<32x128xf32>, vector<2x128xf32> -> vector<2x128xf32>
    %160 = vector.extract_strided_slice %138 {offsets = [0, 128], sizes = [2, 128], strides = [1, 1]} : vector<2x256xf32> to vector<2x128xf32>
    %161 = arith.addf %159, %160 : vector<2x128xf32>
    %162 = arith.addf %161, %12 : vector<2x128xf32>
    %163 = arith.negf %162 : vector<2x128xf32>
    %164 = math.exp %163 : vector<2x128xf32>
    %cst_27 = arith.constant 1.000000e+00 : f32
    %165 = vector.broadcast %cst_27 : f32 to vector<2x128xf32>
    %166 = arith.addf %165, %164 : vector<2x128xf32>
    %167 = arith.divf %165, %166 : vector<2x128xf32>
    %168 = math.tanh %162 : vector<2x128xf32>
    %169 = arith.select %15, %167, %168 : vector<2x128xi1>, vector<2x128xf32>
    %170 = vector.extract_strided_slice %169 {offsets = [0, 0], sizes = [2, 32], strides = [1, 1]} : vector<2x128xf32> to vector<2x32xf32>
    %171 = vector.extract_strided_slice %169 {offsets = [0, 32], sizes = [2, 32], strides = [1, 1]} : vector<2x128xf32> to vector<2x32xf32>
    %172 = vector.extract_strided_slice %169 {offsets = [0, 64], sizes = [2, 32], strides = [1, 1]} : vector<2x128xf32> to vector<2x32xf32>
    %173 = vector.extract_strided_slice %169 {offsets = [0, 96], sizes = [2, 32], strides = [1, 1]} : vector<2x128xf32> to vector<2x32xf32>
    %174 = arith.mulf %171, %134 : vector<2x32xf32>
    %175 = arith.mulf %170, %173 : vector<2x32xf32>
    %176 = arith.addf %174, %175 : vector<2x32xf32>
    %177 = math.tanh %176 : vector<2x32xf32>
    %178 = arith.mulf %172, %177 : vector<2x32xf32>
    %179 = tpu.concatenate %158, %178 in 1 : vector<2x32xf32>, vector<2x32xf32> -> vector<2x64xf32>
    %cst_28 = arith.constant dense<0.000000e+00> : vector<2x256xf32>
    %180 = tpu.matmul %179, %8, %cst_28 {dimension_numbers = #tpu.dot_dimension_numbers<[1], [0], [0], [1], [0, 0, 1, 1], [], []>} : vector<2x64xf32>, vector<64x256xf32>, vector<2x256xf32> -> vector<2x256xf32>
    %181 = vector.extract_strided_slice %7 {offsets = [0, 4, 0], sizes = [2, 1, 128], strides = [1, 1, 1]} : vector<2x8x128xf32> to vector<2x1x128xf32>
    %182 = vector.shape_cast %181 : vector<2x1x128xf32> to vector<2x128xf32>
    %183 = vector.extract_strided_slice %180 {offsets = [0, 0], sizes = [2, 128], strides = [1, 1]} : vector<2x256xf32> to vector<2x128xf32>
    %184 = arith.addf %182, %183 : vector<2x128xf32>
    %185 = arith.negf %184 : vector<2x128xf32>
    %186 = math.exp %185 : vector<2x128xf32>
    %cst_29 = arith.constant 1.000000e+00 : f32
    %187 = vector.broadcast %cst_29 : f32 to vector<2x128xf32>
    %188 = arith.addf %187, %186 : vector<2x128xf32>
    %189 = arith.divf %187, %188 : vector<2x128xf32>
    %190 = math.tanh %184 : vector<2x128xf32>
    %191 = arith.select %15, %189, %190 : vector<2x128xi1>, vector<2x128xf32>
    %192 = vector.extract_strided_slice %191 {offsets = [0, 0], sizes = [2, 32], strides = [1, 1]} : vector<2x128xf32> to vector<2x32xf32>
    %193 = vector.extract_strided_slice %191 {offsets = [0, 32], sizes = [2, 32], strides = [1, 1]} : vector<2x128xf32> to vector<2x32xf32>
    %194 = vector.extract_strided_slice %191 {offsets = [0, 64], sizes = [2, 32], strides = [1, 1]} : vector<2x128xf32> to vector<2x32xf32>
    %195 = vector.extract_strided_slice %191 {offsets = [0, 96], sizes = [2, 32], strides = [1, 1]} : vector<2x128xf32> to vector<2x32xf32>
    %196 = arith.mulf %193, %156 : vector<2x32xf32>
    %197 = arith.mulf %192, %195 : vector<2x32xf32>
    %198 = arith.addf %196, %197 : vector<2x32xf32>
    %199 = math.tanh %198 : vector<2x32xf32>
    %200 = arith.mulf %194, %199 : vector<2x32xf32>
    %cst_30 = arith.constant dense<0.000000e+00> : vector<2x128xf32>
    %201 = tpu.matmul %200, %9, %cst_30 {dimension_numbers = #tpu.dot_dimension_numbers<[1], [0], [0], [1], [0, 0, 1, 1], [], []>} : vector<2x32xf32>, vector<32x128xf32>, vector<2x128xf32> -> vector<2x128xf32>
    %202 = vector.extract_strided_slice %180 {offsets = [0, 128], sizes = [2, 128], strides = [1, 1]} : vector<2x256xf32> to vector<2x128xf32>
    %203 = arith.addf %201, %202 : vector<2x128xf32>
    %204 = arith.addf %203, %12 : vector<2x128xf32>
    %205 = arith.negf %204 : vector<2x128xf32>
    %206 = math.exp %205 : vector<2x128xf32>
    %cst_31 = arith.constant 1.000000e+00 : f32
    %207 = vector.broadcast %cst_31 : f32 to vector<2x128xf32>
    %208 = arith.addf %207, %206 : vector<2x128xf32>
    %209 = arith.divf %207, %208 : vector<2x128xf32>
    %210 = math.tanh %204 : vector<2x128xf32>
    %211 = arith.select %15, %209, %210 : vector<2x128xi1>, vector<2x128xf32>
    %212 = vector.extract_strided_slice %211 {offsets = [0, 0], sizes = [2, 32], strides = [1, 1]} : vector<2x128xf32> to vector<2x32xf32>
    %213 = vector.extract_strided_slice %211 {offsets = [0, 32], sizes = [2, 32], strides = [1, 1]} : vector<2x128xf32> to vector<2x32xf32>
    %214 = vector.extract_strided_slice %211 {offsets = [0, 64], sizes = [2, 32], strides = [1, 1]} : vector<2x128xf32> to vector<2x32xf32>
    %215 = vector.extract_strided_slice %211 {offsets = [0, 96], sizes = [2, 32], strides = [1, 1]} : vector<2x128xf32> to vector<2x32xf32>
    %216 = arith.mulf %213, %176 : vector<2x32xf32>
    %217 = arith.mulf %212, %215 : vector<2x32xf32>
    %218 = arith.addf %216, %217 : vector<2x32xf32>
    %219 = math.tanh %218 : vector<2x32xf32>
    %220 = arith.mulf %214, %219 : vector<2x32xf32>
    %221 = tpu.concatenate %200, %220 in 1 : vector<2x32xf32>, vector<2x32xf32> -> vector<2x64xf32>
    %cst_32 = arith.constant dense<0.000000e+00> : vector<2x256xf32>
    %222 = tpu.matmul %221, %8, %cst_32 {dimension_numbers = #tpu.dot_dimension_numbers<[1], [0], [0], [1], [0, 0, 1, 1], [], []>} : vector<2x64xf32>, vector<64x256xf32>, vector<2x256xf32> -> vector<2x256xf32>
    %223 = vector.extract_strided_slice %7 {offsets = [0, 5, 0], sizes = [2, 1, 128], strides = [1, 1, 1]} : vector<2x8x128xf32> to vector<2x1x128xf32>
    %224 = vector.shape_cast %223 : vector<2x1x128xf32> to vector<2x128xf32>
    %225 = vector.extract_strided_slice %222 {offsets = [0, 0], sizes = [2, 128], strides = [1, 1]} : vector<2x256xf32> to vector<2x128xf32>
    %226 = arith.addf %224, %225 : vector<2x128xf32>
    %227 = arith.negf %226 : vector<2x128xf32>
    %228 = math.exp %227 : vector<2x128xf32>
    %cst_33 = arith.constant 1.000000e+00 : f32
    %229 = vector.broadcast %cst_33 : f32 to vector<2x128xf32>
    %230 = arith.addf %229, %228 : vector<2x128xf32>
    %231 = arith.divf %229, %230 : vector<2x128xf32>
    %232 = math.tanh %226 : vector<2x128xf32>
    %233 = arith.select %15, %231, %232 : vector<2x128xi1>, vector<2x128xf32>
    %234 = vector.extract_strided_slice %233 {offsets = [0, 0], sizes = [2, 32], strides = [1, 1]} : vector<2x128xf32> to vector<2x32xf32>
    %235 = vector.extract_strided_slice %233 {offsets = [0, 32], sizes = [2, 32], strides = [1, 1]} : vector<2x128xf32> to vector<2x32xf32>
    %236 = vector.extract_strided_slice %233 {offsets = [0, 64], sizes = [2, 32], strides = [1, 1]} : vector<2x128xf32> to vector<2x32xf32>
    %237 = vector.extract_strided_slice %233 {offsets = [0, 96], sizes = [2, 32], strides = [1, 1]} : vector<2x128xf32> to vector<2x32xf32>
    %238 = arith.mulf %235, %198 : vector<2x32xf32>
    %239 = arith.mulf %234, %237 : vector<2x32xf32>
    %240 = arith.addf %238, %239 : vector<2x32xf32>
    %241 = math.tanh %240 : vector<2x32xf32>
    %242 = arith.mulf %236, %241 : vector<2x32xf32>
    %cst_34 = arith.constant dense<0.000000e+00> : vector<2x128xf32>
    %243 = tpu.matmul %242, %9, %cst_34 {dimension_numbers = #tpu.dot_dimension_numbers<[1], [0], [0], [1], [0, 0, 1, 1], [], []>} : vector<2x32xf32>, vector<32x128xf32>, vector<2x128xf32> -> vector<2x128xf32>
    %244 = vector.extract_strided_slice %222 {offsets = [0, 128], sizes = [2, 128], strides = [1, 1]} : vector<2x256xf32> to vector<2x128xf32>
    %245 = arith.addf %243, %244 : vector<2x128xf32>
    %246 = arith.addf %245, %12 : vector<2x128xf32>
    %247 = arith.negf %246 : vector<2x128xf32>
    %248 = math.exp %247 : vector<2x128xf32>
    %cst_35 = arith.constant 1.000000e+00 : f32
    %249 = vector.broadcast %cst_35 : f32 to vector<2x128xf32>
    %250 = arith.addf %249, %248 : vector<2x128xf32>
    %251 = arith.divf %249, %250 : vector<2x128xf32>
    %252 = math.tanh %246 : vector<2x128xf32>
    %253 = arith.select %15, %251, %252 : vector<2x128xi1>, vector<2x128xf32>
    %254 = vector.extract_strided_slice %253 {offsets = [0, 0], sizes = [2, 32], strides = [1, 1]} : vector<2x128xf32> to vector<2x32xf32>
    %255 = vector.extract_strided_slice %253 {offsets = [0, 32], sizes = [2, 32], strides = [1, 1]} : vector<2x128xf32> to vector<2x32xf32>
    %256 = vector.extract_strided_slice %253 {offsets = [0, 64], sizes = [2, 32], strides = [1, 1]} : vector<2x128xf32> to vector<2x32xf32>
    %257 = vector.extract_strided_slice %253 {offsets = [0, 96], sizes = [2, 32], strides = [1, 1]} : vector<2x128xf32> to vector<2x32xf32>
    %258 = arith.mulf %255, %218 : vector<2x32xf32>
    %259 = arith.mulf %254, %257 : vector<2x32xf32>
    %260 = arith.addf %258, %259 : vector<2x32xf32>
    %261 = math.tanh %260 : vector<2x32xf32>
    %262 = arith.mulf %256, %261 : vector<2x32xf32>
    %263 = tpu.concatenate %242, %262 in 1 : vector<2x32xf32>, vector<2x32xf32> -> vector<2x64xf32>
    %cst_36 = arith.constant dense<0.000000e+00> : vector<2x256xf32>
    %264 = tpu.matmul %263, %8, %cst_36 {dimension_numbers = #tpu.dot_dimension_numbers<[1], [0], [0], [1], [0, 0, 1, 1], [], []>} : vector<2x64xf32>, vector<64x256xf32>, vector<2x256xf32> -> vector<2x256xf32>
    %265 = vector.extract_strided_slice %7 {offsets = [0, 6, 0], sizes = [2, 1, 128], strides = [1, 1, 1]} : vector<2x8x128xf32> to vector<2x1x128xf32>
    %266 = vector.shape_cast %265 : vector<2x1x128xf32> to vector<2x128xf32>
    %267 = vector.extract_strided_slice %264 {offsets = [0, 0], sizes = [2, 128], strides = [1, 1]} : vector<2x256xf32> to vector<2x128xf32>
    %268 = arith.addf %266, %267 : vector<2x128xf32>
    %269 = arith.negf %268 : vector<2x128xf32>
    %270 = math.exp %269 : vector<2x128xf32>
    %cst_37 = arith.constant 1.000000e+00 : f32
    %271 = vector.broadcast %cst_37 : f32 to vector<2x128xf32>
    %272 = arith.addf %271, %270 : vector<2x128xf32>
    %273 = arith.divf %271, %272 : vector<2x128xf32>
    %274 = math.tanh %268 : vector<2x128xf32>
    %275 = arith.select %15, %273, %274 : vector<2x128xi1>, vector<2x128xf32>
    %276 = vector.extract_strided_slice %275 {offsets = [0, 0], sizes = [2, 32], strides = [1, 1]} : vector<2x128xf32> to vector<2x32xf32>
    %277 = vector.extract_strided_slice %275 {offsets = [0, 32], sizes = [2, 32], strides = [1, 1]} : vector<2x128xf32> to vector<2x32xf32>
    %278 = vector.extract_strided_slice %275 {offsets = [0, 64], sizes = [2, 32], strides = [1, 1]} : vector<2x128xf32> to vector<2x32xf32>
    %279 = vector.extract_strided_slice %275 {offsets = [0, 96], sizes = [2, 32], strides = [1, 1]} : vector<2x128xf32> to vector<2x32xf32>
    %280 = arith.mulf %277, %240 : vector<2x32xf32>
    %281 = arith.mulf %276, %279 : vector<2x32xf32>
    %282 = arith.addf %280, %281 : vector<2x32xf32>
    %283 = math.tanh %282 : vector<2x32xf32>
    %284 = arith.mulf %278, %283 : vector<2x32xf32>
    %cst_38 = arith.constant dense<0.000000e+00> : vector<2x128xf32>
    %285 = tpu.matmul %284, %9, %cst_38 {dimension_numbers = #tpu.dot_dimension_numbers<[1], [0], [0], [1], [0, 0, 1, 1], [], []>} : vector<2x32xf32>, vector<32x128xf32>, vector<2x128xf32> -> vector<2x128xf32>
    %286 = vector.extract_strided_slice %264 {offsets = [0, 128], sizes = [2, 128], strides = [1, 1]} : vector<2x256xf32> to vector<2x128xf32>
    %287 = arith.addf %285, %286 : vector<2x128xf32>
    %288 = arith.addf %287, %12 : vector<2x128xf32>
    %289 = arith.negf %288 : vector<2x128xf32>
    %290 = math.exp %289 : vector<2x128xf32>
    %cst_39 = arith.constant 1.000000e+00 : f32
    %291 = vector.broadcast %cst_39 : f32 to vector<2x128xf32>
    %292 = arith.addf %291, %290 : vector<2x128xf32>
    %293 = arith.divf %291, %292 : vector<2x128xf32>
    %294 = math.tanh %288 : vector<2x128xf32>
    %295 = arith.select %15, %293, %294 : vector<2x128xi1>, vector<2x128xf32>
    %296 = vector.extract_strided_slice %295 {offsets = [0, 0], sizes = [2, 32], strides = [1, 1]} : vector<2x128xf32> to vector<2x32xf32>
    %297 = vector.extract_strided_slice %295 {offsets = [0, 32], sizes = [2, 32], strides = [1, 1]} : vector<2x128xf32> to vector<2x32xf32>
    %298 = vector.extract_strided_slice %295 {offsets = [0, 64], sizes = [2, 32], strides = [1, 1]} : vector<2x128xf32> to vector<2x32xf32>
    %299 = vector.extract_strided_slice %295 {offsets = [0, 96], sizes = [2, 32], strides = [1, 1]} : vector<2x128xf32> to vector<2x32xf32>
    %300 = arith.mulf %297, %260 : vector<2x32xf32>
    %301 = arith.mulf %296, %299 : vector<2x32xf32>
    %302 = arith.addf %300, %301 : vector<2x32xf32>
    %303 = math.tanh %302 : vector<2x32xf32>
    %304 = arith.mulf %298, %303 : vector<2x32xf32>
    %305 = tpu.concatenate %284, %304 in 1 : vector<2x32xf32>, vector<2x32xf32> -> vector<2x64xf32>
    %cst_40 = arith.constant dense<0.000000e+00> : vector<2x256xf32>
    %306 = tpu.matmul %305, %8, %cst_40 {dimension_numbers = #tpu.dot_dimension_numbers<[1], [0], [0], [1], [0, 0, 1, 1], [], []>} : vector<2x64xf32>, vector<64x256xf32>, vector<2x256xf32> -> vector<2x256xf32>
    %307 = vector.extract_strided_slice %7 {offsets = [0, 7, 0], sizes = [2, 1, 128], strides = [1, 1, 1]} : vector<2x8x128xf32> to vector<2x1x128xf32>
    %308 = vector.shape_cast %307 : vector<2x1x128xf32> to vector<2x128xf32>
    %309 = vector.extract_strided_slice %306 {offsets = [0, 0], sizes = [2, 128], strides = [1, 1]} : vector<2x256xf32> to vector<2x128xf32>
    %310 = arith.addf %308, %309 : vector<2x128xf32>
    %311 = arith.negf %310 : vector<2x128xf32>
    %312 = math.exp %311 : vector<2x128xf32>
    %cst_41 = arith.constant 1.000000e+00 : f32
    %313 = vector.broadcast %cst_41 : f32 to vector<2x128xf32>
    %314 = arith.addf %313, %312 : vector<2x128xf32>
    %315 = arith.divf %313, %314 : vector<2x128xf32>
    %316 = math.tanh %310 : vector<2x128xf32>
    %317 = arith.select %15, %315, %316 : vector<2x128xi1>, vector<2x128xf32>
    %318 = vector.extract_strided_slice %317 {offsets = [0, 0], sizes = [2, 32], strides = [1, 1]} : vector<2x128xf32> to vector<2x32xf32>
    %319 = vector.extract_strided_slice %317 {offsets = [0, 32], sizes = [2, 32], strides = [1, 1]} : vector<2x128xf32> to vector<2x32xf32>
    %320 = vector.extract_strided_slice %317 {offsets = [0, 64], sizes = [2, 32], strides = [1, 1]} : vector<2x128xf32> to vector<2x32xf32>
    %321 = vector.extract_strided_slice %317 {offsets = [0, 96], sizes = [2, 32], strides = [1, 1]} : vector<2x128xf32> to vector<2x32xf32>
    %322 = arith.mulf %319, %282 : vector<2x32xf32>
    %323 = arith.mulf %318, %321 : vector<2x32xf32>
    %324 = arith.addf %322, %323 : vector<2x32xf32>
    %325 = math.tanh %324 : vector<2x32xf32>
    %326 = arith.mulf %320, %325 : vector<2x32xf32>
    %cst_42 = arith.constant dense<0.000000e+00> : vector<2x128xf32>
    %327 = tpu.matmul %326, %9, %cst_42 {dimension_numbers = #tpu.dot_dimension_numbers<[1], [0], [0], [1], [0, 0, 1, 1], [], []>} : vector<2x32xf32>, vector<32x128xf32>, vector<2x128xf32> -> vector<2x128xf32>
    %328 = vector.extract_strided_slice %306 {offsets = [0, 128], sizes = [2, 128], strides = [1, 1]} : vector<2x256xf32> to vector<2x128xf32>
    %329 = arith.addf %327, %328 : vector<2x128xf32>
    %330 = arith.addf %329, %12 : vector<2x128xf32>
    %331 = arith.negf %330 : vector<2x128xf32>
    %332 = math.exp %331 : vector<2x128xf32>
    %cst_43 = arith.constant 1.000000e+00 : f32
    %333 = vector.broadcast %cst_43 : f32 to vector<2x128xf32>
    %334 = arith.addf %333, %332 : vector<2x128xf32>
    %335 = arith.divf %333, %334 : vector<2x128xf32>
    %336 = math.tanh %330 : vector<2x128xf32>
    %337 = arith.select %15, %335, %336 : vector<2x128xi1>, vector<2x128xf32>
    %338 = vector.extract_strided_slice %337 {offsets = [0, 0], sizes = [2, 32], strides = [1, 1]} : vector<2x128xf32> to vector<2x32xf32>
    %339 = vector.extract_strided_slice %337 {offsets = [0, 32], sizes = [2, 32], strides = [1, 1]} : vector<2x128xf32> to vector<2x32xf32>
    %340 = vector.extract_strided_slice %337 {offsets = [0, 64], sizes = [2, 32], strides = [1, 1]} : vector<2x128xf32> to vector<2x32xf32>
    %341 = vector.extract_strided_slice %337 {offsets = [0, 96], sizes = [2, 32], strides = [1, 1]} : vector<2x128xf32> to vector<2x32xf32>
    %342 = arith.mulf %339, %302 : vector<2x32xf32>
    %343 = arith.mulf %338, %341 : vector<2x32xf32>
    %344 = arith.addf %342, %343 : vector<2x32xf32>
    %345 = math.tanh %344 : vector<2x32xf32>
    %346 = arith.mulf %340, %345 : vector<2x32xf32>
    %347 = math.tanh %346 : vector<2x32xf32>
    %c0_44 = arith.constant 0 : index
    %c0_45 = arith.constant 0 : index
    %348 = vector.load %arg6[%c0_44, %c0_45] : memref<32x128xf32, #tpu.memory_space<vmem>>, vector<32x128xf32>
    %cst_46 = arith.constant dense<0.000000e+00> : vector<2x128xf32>
    %349 = tpu.matmul %347, %348, %cst_46 {dimension_numbers = #tpu.dot_dimension_numbers<[1], [0], [0], [1], [0, 0, 1, 1], [], []>} : vector<2x32xf32>, vector<32x128xf32>, vector<2x128xf32> -> vector<2x128xf32>
    %c0_47 = arith.constant 0 : index
    %c0_48 = arith.constant 0 : index
    %350 = vector.load %arg7[%c0_47, %c0_48] : memref<1x128xf32, #tpu.memory_space<vmem>>, vector<1x128xf32>
    %351 = vector.broadcast %350 : vector<1x128xf32> to vector<2x128xf32>
    %352 = arith.addf %349, %351 : vector<2x128xf32>
    %353 = tpu.iota {dimensions = array<i32: 1>} : vector<2x128xi32>
    %c1_i32 = arith.constant 1 : i32
    %354 = vector.broadcast %c1_i32 : i32 to vector<2x128xi32>
    %355 = arith.cmpi sge, %353, %354 : vector<2x128xi32>
    %c5_i32 = arith.constant 5 : i32
    %356 = vector.broadcast %c5_i32 : i32 to vector<2x128xi32>
    %357 = arith.cmpi slt, %353, %356 : vector<2x128xi32>
    %358 = arith.andi %355, %357 : vector<2x128xi1>
    %359 = arith.negf %352 : vector<2x128xf32>
    %360 = math.exp %359 : vector<2x128xf32>
    %cst_49 = arith.constant 1.000000e+00 : f32
    %361 = vector.broadcast %cst_49 : f32 to vector<2x128xf32>
    %362 = arith.addf %361, %360 : vector<2x128xf32>
    %363 = arith.divf %361, %362 : vector<2x128xf32>
    %364 = arith.select %358, %363, %352 : vector<2x128xi1>, vector<2x128xf32>
    %c0_50 = arith.constant 0 : index
    %c0_51 = arith.constant 0 : index
    %365 = vector.load %arg8[%c0_50, %c0_51] : memref<2x128xf32, #tpu.memory_space<vmem>>, vector<2x128xf32>
    tpu.vector_store %arg8[%c0_50, %c0_51], %364 {strides = array<i32>} : memref<2x128xf32, #tpu.memory_space<vmem>>, vector<2x128xf32>,
    return
  }
}

</mosaic_0001>

<llo_original>
// kernel: policy_forward.1
$region0: #{policy_forward.1}
  #allocation0 [shape = 'u32[]', space=smem, size = 0x4, offset = 0x4, fixed_abs, tag = 'smem constant byte address 0x4 - core index']
  #allocation1 [shape = 'u32[144,128]{1,0:T(1,128)}', space=vmem, size = 0x12000, scoped, tag = 'internal scratch']
  %s0 = inlined_call_operand.vmem [shape: f32[2,8,6], index: 0, kind: input, shape index: {}]
  %s1 = inlined_call_operand.vmem [shape: f32[6,128], index: 1, kind: input, shape index: {}]
  %s2 = inlined_call_operand.vmem [shape: f32[1,128], index: 2, kind: input, shape index: {}]
  %s3 = inlined_call_operand.hbm [shape: f32[64,256], index: 3, kind: input, shape index: {}]
  %s4 = inlined_call_operand.vmem [shape: f32[32,128], index: 4, kind: input, shape index: {}]
  %s5 = inlined_call_operand.vmem [shape: f32[1,128], index: 5, kind: input, shape index: {}]
  %s6 = inlined_call_operand.hbm [shape: f32[32,128], index: 6, kind: input, shape index: {}]
  %s7 = inlined_call_operand.hbm [shape: f32[1,128], index: 7, kind: input, shape index: {}]
  %s8 = inlined_call_operand.vmem [shape: f32[2,128], index: 8, kind: output, shape index: {}]
  %s9 = sld [smem:[#allocation0]]
  $region54: #{policy_forward.1} parent=0
    _
  %s11 = ssub.s32 1, %s9
  %s12 = scalar_select 0, %s11, %s9
  $region1: #{policy_forward.1} parent=0
    #allocation2 [shape = 'u8[65536]{0}', space=vmem, size = 0x10000, scoped, tag = 'input window, operand 3, single buffered']
    #allocation3 [shape = 's32[1]{0}', space=sflag, size = 0x4, scoped, tag = 'scoped memory for policy_forward.1']
    #allocation4 [shape = 'u8[16384]{0}', space=vmem, size = 0x4000, scoped, tag = 'input window, operand 6, single buffered']
    #allocation5 [shape = 's32[1]{0}', space=sflag, size = 0x4, scoped, tag = 'scoped memory for policy_forward.1']
    #allocation6 [shape = 'u8[512]{0}', space=vmem, size = 0x400, scoped, tag = 'input window, operand 7, single buffered']
    %13 = vsyncpa [#allocation3], 0
    %14 = vsyncpa [#allocation5], 0
    // Predicated region
    $region2: #{policy_forward.1} parent=1 // pred_check
      _
    $region3: #{policy_forward.1} parent=1 // pred_check_branch
      %16 = sbr.rel (0) target = $region5
    $region4: #{policy_forward.1} parent=1 // pred_region
      _
    $region5: #{policy_forward.1} parent=1 // pred_fallthru
      _
    // Predicated region
    $region6: #{policy_forward.1} parent=1 // pred_check
      _
    $region7: #{policy_forward.1} parent=1 // pred_check_branch
      %18 = sbr.rel (0) target = $region9
    $region8: #{policy_forward.1} parent=1 // pred_region
      _
    $region9: #{policy_forward.1} parent=1 // pred_fallthru
      _
    // Predicated region
    $region10: #{policy_forward.1} parent=1 // pred_check
      _
    $region11: #{policy_forward.1} parent=1 // pred_check_branch
      %20 = sbr.rel (0) target = $region13
    $region12: #{policy_forward.1} parent=1 // pred_region
      _
    $region13: #{policy_forward.1} parent=1 // pred_fallthru
      _
    // Predicated region
    $region14: #{policy_forward.1} parent=1 // pred_check
      _
    $region15: #{policy_forward.1} parent=1 // pred_check_branch
      %22 = sbr.rel (0) target = $region17
    $region16: #{policy_forward.1} parent=1 // pred_region
      %s24 = ssub.s32 2048, 2048
      %25 = vsyncadd [#allocation3], %s24
      %s26 = sshll.u32 [#allocation2], 4
      %s27 = int_to_ptr.vmem [resolvable:$true] %s26
      %32 = dma.hbm_to_vmem [thread:$0]  %s3, 2048, %s27, [#allocation3], 256, 256, 16
    $region17: #{policy_forward.1} parent=1 // pred_fallthru
      _
    // Predicated region
    $region18: #{policy_forward.1} parent=1 // pred_check
      _
    $region19: #{policy_forward.1} parent=1 // pred_check_branch
      %34 = sbr.rel (0) target = $region21
    $region20: #{policy_forward.1} parent=1 // pred_region
      _
    $region21: #{policy_forward.1} parent=1 // pred_fallthru
      _
    // Predicated region
    $region22: #{policy_forward.1} parent=1 // pred_check
      _
    $region23: #{policy_forward.1} parent=1 // pred_check_branch
      %36 = sbr.rel (0) target = $region25
    $region24: #{policy_forward.1} parent=1 // pred_region
      _
    $region25: #{policy_forward.1} parent=1 // pred_fallthru
      _
    // Predicated region
    $region26: #{policy_forward.1} parent=1 // pred_check
      _
    $region27: #{policy_forward.1} parent=1 // pred_check_branch
      %38 = sbr.rel (0) target = $region29
    $region28: #{policy_forward.1} parent=1 // pred_region
      %s40 = ssub.s32 512, 512
      %41 = vsyncadd [#allocation5], %s40
      %s42 = sshll.u32 [#allocation4], 4
      %s43 = int_to_ptr.vmem [resolvable:$true] %s42
      %48 = dma.hbm_to_vmem [thread:$0]  %s6, 512, %s43, [#allocation5], 128, 128, 8
    $region29: #{policy_forward.1} parent=1 // pred_fallthru
      _
    // Predicated region
    $region30: #{policy_forward.1} parent=1 // pred_check
      _
    $region31: #{policy_forward.1} parent=1 // pred_check_branch
      %50 = sbr.rel (0) target = $region33
    $region32: #{policy_forward.1} parent=1 // pred_region
      %s52 = ssub.s32 16, 16
      %53 = vsyncadd [#allocation5], %s52
      %s55 = sshll.u32 [#allocation6], 4
      %s56 = int_to_ptr.vmem [resolvable:$true] %s55
      %58 = dma.hbm_to_vmem [thread:$0]  %s7, 16, %s56, [#allocation5]
    $region33: #{policy_forward.1} parent=1 // pred_fallthru
      _
    // Predicated region
    $region34: #{policy_forward.1} parent=1 // pred_check
      _
    $region35: #{policy_forward.1} parent=1 // pred_check_branch
      %60 = sbr.rel (0) target = $region37
    $region36: #{policy_forward.1} parent=1 // pred_region
      %61 = dma.done [#allocation3], 2048
    $region37: #{policy_forward.1} parent=1 // pred_fallthru
      _
    // Predicated region
    $region38: #{policy_forward.1} parent=1 // pred_check
      _
    $region39: #{policy_forward.1} parent=1 // pred_check_branch
      %63 = sbr.rel (0) target = $region41
    $region40: #{policy_forward.1} parent=1 // pred_region
      %64 = dma.done [#allocation5], 512
    $region41: #{policy_forward.1} parent=1 // pred_fallthru
      _
    // Predicated region
    $region42: #{policy_forward.1} parent=1 // pred_check
      _
    $region43: #{policy_forward.1} parent=1 // pred_check_branch
      %66 = sbr.rel (0) target = $region45
    $region44: #{policy_forward.1} parent=1 // pred_region
      %67 = dma.done [#allocation5], 16
    $region45: #{policy_forward.1} parent=1 // pred_fallthru
      _
    %v68 = vld [vmem:[%s0] sm:$0xff]
    %v69 = vld [vmem:[%s0 + $0x8] sm:$0xff]
    %v70 = vld [vmem:[%s1] sm:$0x3f]
    %v71 = vld [vmem:[%s2] sm:$0x1]
    %v73 = vlaneseq
    %v74 = vshrl.u32 %v73, 7
    %v75 = vsub.s32 0, %v74
    %v76 = vrot.slane %v71, %v75
    %vm78 = vcmask 48128
    %v80 = vsel %vm78, %v68, 0
    %v83 = vsel %vm78, %v69, 0
    %vm85 = vcmask 1045504
    %v87 = vsel %vm85, %v70, 0
    %89 = vmatprep.subr.mxu0 0.0
    %90 = vmatpush1.msra.mxu0 %v87
    %91 = vmatprep.subr.mxu0 0.0
    %92 = vmatpush1.msra.mxu0 0.0
    %93 = vmatprep.subr.mxu0 0.0
    %94 = vmatpush1.msra.mxu0 0.0
    %95 = vmatprep.subr.mxu0 0.0
    %96 = vmatpush1.msra.mxu0 0.0
    %97 = vmatprep.subr.mxu0 0.0
    %98 = vmatpush1.msra.mxu0 0.0
    %99 = vmatprep.subr.mxu0 0.0
    %100 = vmatpush1.msra.mxu0 0.0
    %101 = vmatprep.subr.mxu0 0.0
    %102 = vmatpush1.msra.mxu0 0.0
    %103 = vmatprep.subr.mxu0 0.0
    %104 = vmatpush1.msra.mxu0 0.0
    %105 = vmatprep.subr.mxu0 0.0
    %106 = vmatpush1.msra.mxu0 0.0
    %107 = vmatprep.subr.mxu0 0.0
    %108 = vmatpush1.msra.mxu0 0.0
    %109 = vmatprep.subr.mxu0 0.0
    %110 = vmatpush1.msra.mxu0 0.0
    %111 = vmatprep.subr.mxu0 0.0
    %112 = vmatpush1.msra.mxu0 0.0
    %113 = vmatprep.subr.mxu0 0.0
    %114 = vmatpush1.msra.mxu0 0.0
    %115 = vmatprep.subr.mxu0 0.0
    %116 = vmatpush1.msra.mxu0 0.0
    %117 = vmatprep.subr.mxu0 0.0
    %118 = vmatpush1.msra.mxu0 0.0
    %119 = vmatprep.subr.mxu0 0.0
    %120 = vmatpush1.msra.mxu0 0.0
    %121 = vmatprep.subr.mxu0 0.0
    %122 = vmatpush1.msra.mxu0 0.0
    %123 = vmatprep.subr.mxu0 0.0
    %124 = vmatpush1.msra.mxu0 0.0
    %125 = vmatprep.subr.mxu0 0.0
    %126 = vmatpush1.msra.mxu0 0.0
    %127 = vmatprep.subr.mxu0 0.0
    %128 = vmatpush1.msra.mxu0 0.0
    %129 = vmatprep.subr.mxu0 0.0
    %130 = vmatpush1.msra.mxu0 0.0
    %131 = vmatprep.subr.mxu0 0.0
    %132 = vmatpush1.msra.mxu0 0.0
    %133 = vmatprep.subr.mxu0 0.0
    %134 = vmatpush1.msra.mxu0 0.0
    %135 = vmatprep.subr.mxu0 0.0
    %136 = vmatpush1.msra.mxu0 0.0
    %137 = vmatprep.subr.mxu0 0.0
    %138 = vmatpush1.msra.mxu0 0.0
    %139 = vmatprep.subr.mxu0 0.0
    %140 = vmatpush1.msra.mxu0 0.0
    %141 = vmatprep.subr.mxu0 0.0
    %142 = vmatpush1.msra.mxu0 0.0
    %143 = vmatprep.subr.mxu0 0.0
    %144 = vmatpush1.msra.mxu0 0.0
    %145 = vmatprep.subr.mxu0 0.0
    %146 = vmatpush1.msra.mxu0 0.0
    %147 = vmatprep.subr.mxu0 0.0
    %148 = vmatpush1.msra.mxu0 0.0
    %149 = vmatprep.subr.mxu0 0.0
    %150 = vmatpush1.msra.mxu0 0.0
    %151 = vmatprep.subr.mxu0 0.0
    %152 = vmatpush1.msra.mxu0 0.0
    %153 = vmatprep.mubr.f32.mxu0 0.0
    %154 = vmatmul.mubr.f32.gmra.mrb[0].mxu0 %v80
    %v155 = vpop.f32.mrb[0].mxu0
    %v156 = vadd.f32 %v76, %v155
    %v157 = vpop.f32.mrb[0].mxu0
    %158 = vmatprep.mubr.f32.mxu0 0.0
    %159 = vmatmul.mubr.f32.gmra.mrb[0].mxu0 %v83
    %v160 = vpop.f32.mrb[0].mxu0
    %v161 = vadd.f32 %v76, %v160
    %v162 = vpop.f32.mrb[0].mxu0
    %163 = vdwg.mxu0
    %v164 = vld [vmem:[#allocation2] sm:$0xff]
    %v165 = vld [vmem:[#allocation2 + $0x8] sm:$0xff]
    %v166 = vld [vmem:[#allocation2 + $0x10] sm:$0xff]
    %v167 = vld [vmem:[#allocation2 + $0x18] sm:$0xff]
    %v168 = vld [vmem:[#allocation2 + $0x20] sm:$0xff]
    %v169 = vld [vmem:[#allocation2 + $0x28] sm:$0xff]
    %v170 = vld [vmem:[#allocation2 + $0x30] sm:$0xff]
    %v171 = vld [vmem:[#allocation2 + $0x38] sm:$0xff]
    %v172 = vld [vmem:[#allocation2 + $0x40] sm:$0xff]
    %v173 = vld [vmem:[#allocation2 + $0x48] sm:$0xff]
    %v174 = vld [vmem:[#allocation2 + $0x50] sm:$0xff]
    %v175 = vld [vmem:[#allocation2 + $0x58] sm:$0xff]
    %v176 = vld [vmem:[#allocation2 + $0x60] sm:$0xff]
    %v177 = vld [vmem:[#allocation2 + $0x68] sm:$0xff]
    %v178 = vld [vmem:[#allocation2 + $0x70] sm:$0xff]
    %v179 = vld [vmem:[#allocation2 + $0x78] sm:$0xff]
    %v180 = vld [vmem:[%s4] sm:$0xff]
    %v181 = vld [vmem:[%s4 + $0x8] sm:$0xff]
    %v182 = vld [vmem:[%s4 + $0x10] sm:$0xff]
    %v183 = vld [vmem:[%s4 + $0x18] sm:$0xff]
    %v184 = vld [vmem:[%s5] sm:$0x1]
    %v186 = vlaneseq
    %v187 = vshrl.u32 %v186, 7
    %v188 = vsub.s32 0, %v187
    %v189 = vrot.slane %v184, %v188
    %v191 = vlaneseq
    %v192 = vand.u32 %v191, 127
    %vm193 = vcmp.lt.s32.totalorder %v192, 96
    %v194 = vxor.u32 %v156, 2147483648
    %v195 = vxor.u32 %v161, 2147483648
    %v196 = vmul.f32 %v194, 1.442695
    %v197 = vpow.pop %v196
    %v198 = vmul.f32 %v195, 1.442695
    %v199 = vpow.pop %v198
    %v200 = vadd.f32 %v197, 1.0
    %v201 = vadd.f32 %v199, 1.0
    %v202 = vrcp.pop %v200
    %v203 = vmul.f32 1.0, %v202
    %v204 = vrcp.pop %v201
    %v205 = vmul.f32 1.0, %v204
    %v206 = vtanh.pop %v156
    %v207 = vtanh.pop %v161
    %v210 = vrot.slane %v205, 7
    %vm211 = vcmask 1041409
    %v212 = vsel %vm211, %v210, %v203
    %v216 = vrot.slane %v207, 7
    %v217 = vsel %vm211, %v216, %v206
    %v219 = vsel %vm193, %v212, %v217
    %v220 = vmul.f32 %v219, 0.0
    %222 = vrot.lane.b32.xlu0 %v219, 32
    %v223 = vpop.permute.xlu0 %222
    %v225 = vmul.f32 %v219, %v223
    %227 = vrot.lane.b32.xlu0 %v225, 32
    %v228 = vpop.permute.xlu0 %227
    %v230 = vadd.f32 %v220, %v228
    %v231 = vtanh.pop %v230
    %233 = vrot.lane.b32.xlu0 %v231, 32
    %v234 = vpop.permute.xlu0 %233
    %v236 = vmul.f32 %v219, %v234
    %238 = vrot.lane.b32.xlu0 %v236, 64
    %v239 = vpop.permute.xlu0 %238
    %vm240 = vcmask 261120
    %v241 = vsel %vm240, %v239, 0
    %243 = vmatprep.subr.mxu0 0.0
    %244 = vmatpush1.msra.mxu0 %v180
    %245 = vmatprep.subr.mxu0 0.0
    %246 = vmatpush1.msra.mxu0 %v181
    %247 = vmatprep.subr.mxu0 0.0
    %248 = vmatpush1.msra.mxu0 %v182
    %249 = vmatprep.subr.mxu0 0.0
    %250 = vmatpush1.msra.mxu0 %v183
    %251 = vmatprep.subr.mxu0 0.0
    %252 = vmatpush1.msra.mxu0 0.0
    %253 = vmatprep.subr.mxu0 0.0
    %254 = vmatpush1.msra.mxu0 0.0
    %255 = vmatprep.subr.mxu0 0.0
    %256 = vmatpush1.msra.mxu0 0.0
    %257 = vmatprep.subr.mxu0 0.0
    %258 = vmatpush1.msra.mxu0 0.0
    %259 = vmatprep.subr.mxu0 0.0
    %260 = vmatpush1.msra.mxu0 0.0
    %261 = vmatprep.subr.mxu0 0.0
    %262 = vmatpush1.msra.mxu0 0.0
    %263 = vmatprep.subr.mxu0 0.0
    %264 = vmatpush1.msra.mxu0 0.0
    %265 = vmatprep.subr.mxu0 0.0
    %266 = vmatpush1.msra.mxu0 0.0
    %267 = vmatprep.subr.mxu0 0.0
    %268 = vmatpush1.msra.mxu0 0.0
    %269 = vmatprep.subr.mxu0 0.0
    %270 = vmatpush1.msra.mxu0 0.0
    %271 = vmatprep.subr.mxu0 0.0
    %272 = vmatpush1.msra.mxu0 0.0
    %273 = vmatprep.subr.mxu0 0.0
    %274 = vmatpush1.msra.mxu0 0.0
    %275 = vmatprep.subr.mxu0 0.0
    %276 = vmatpush1.msra.mxu0 0.0
    %277 = vmatprep.subr.mxu0 0.0
    %278 = vmatpush1.msra.mxu0 0.0
    %279 = vmatprep.subr.mxu0 0.0
    %280 = vmatpush1.msra.mxu0 0.0
    %281 = vmatprep.subr.mxu0 0.0
    %282 = vmatpush1.msra.mxu0 0.0
    %283 = vmatprep.subr.mxu0 0.0
    %284 = vmatpush1.msra.mxu0 0.0
    %285 = vmatprep.subr.mxu0 0.0
    %286 = vmatpush1.msra.mxu0 0.0
    %287 = vmatprep.subr.mxu0 0.0
    %288 = vmatpush1.msra.mxu0 0.0
    %289 = vmatprep.subr.mxu0 0.0
    %290 = vmatpush1.msra.mxu0 0.0
    %291 = vmatprep.subr.mxu0 0.0
    %292 = vmatpush1.msra.mxu0 0.0
    %293 = vmatprep.subr.mxu0 0.0
    %294 = vmatpush1.msra.mxu0 0.0
    %295 = vmatprep.subr.mxu0 0.0
    %296 = vmatpush1.msra.mxu0 0.0
    %297 = vmatprep.subr.mxu0 0.0
    %298 = vmatpush1.msra.mxu0 0.0
    %299 = vmatprep.subr.mxu0 0.0
    %300 = vmatpush1.msra.mxu0 0.0
    %301 = vmatprep.subr.mxu0 0.0
    %302 = vmatpush1.msra.mxu0 0.0
    %303 = vmatprep.subr.mxu0 0.0
    %304 = vmatpush1.msra.mxu0 0.0
    %305 = vmatprep.subr.mxu0 0.0
    %306 = vmatpush1.msra.mxu0 0.0
    %307 = vmatprep.mubr.f32.mxu0 0.0
    %308 = vmatmul.mubr.f32.gmra.mrb[0].mxu0 %v241
    %v309 = vpop.f32.mrb[0].mxu0
    %v310 = vadd.f32 %v189, %v309
    %v311 = vpop.f32.mrb[0].mxu0
    %312 = vdwg.mxu0
    %v313 = vxor.u32 %v310, 2147483648
    %v314 = vmul.f32 %v313, 1.442695
    %v315 = vpow.pop %v314
    %v316 = vadd.f32 %v315, 1.0
    %v317 = vrcp.pop %v316
    %v318 = vmul.f32 1.0, %v317
    %v319 = vtanh.pop %v310
    %v320 = vsel %vm193, %v318, %v319
    %v321 = vmul.f32 %v320, 0.0
    %323 = vrot.lane.b32.xlu0 %v320, 32
    %v324 = vpop.permute.xlu0 %323
    %v326 = vmul.f32 %v320, %v324
    %328 = vrot.lane.b32.xlu0 %v326, 32
    %v329 = vpop.permute.xlu0 %328
    %v331 = vadd.f32 %v321, %v329
    %v332 = vtanh.pop %v331
    %334 = vrot.lane.b32.xlu0 %v332, 32
    %v335 = vpop.permute.xlu0 %334
    %v337 = vmul.f32 %v320, %v335
    %340 = vrot.lane.b32.xlu0 %v337, 96
    %v341 = vpop.permute.xlu0 %340
    %v343 = vsel %vm240, %v239, %v341
    %vm344 = vcmask 523264
    %v346 = vsel %vm344, %v343, 0
    %348 = vmatprep.subr.mxu0 %v165
    %349 = vmatpush1.msra.mxu0 %v164
    %350 = vmatprep.subr.mxu0 %v167
    %351 = vmatpush1.msra.mxu0 %v166
    %352 = vmatprep.subr.mxu0 %v169
    %353 = vmatpush1.msra.mxu0 %v168
    %354 = vmatprep.subr.mxu0 %v171
    %355 = vmatpush1.msra.mxu0 %v170
    %356 = vmatprep.subr.mxu0 %v173
    %357 = vmatpush1.msra.mxu0 %v172
    %358 = vmatprep.subr.mxu0 %v175
    %359 = vmatpush1.msra.mxu0 %v174
    %360 = vmatprep.subr.mxu0 %v177
    %361 = vmatpush1.msra.mxu0 %v176
    %362 = vmatprep.subr.mxu0 %v179
    %363 = vmatpush1.msra.mxu0 %v178
    %364 = vmatprep.subr.mxu0 0.0
    %365 = vmatpush1.msra.mxu0 0.0
    %366 = vmatprep.subr.mxu0 0.0
    %367 = vmatpush1.msra.mxu0 0.0
    %368 = vmatprep.subr.mxu0 0.0
    %369 = vmatpush1.msra.mxu0 0.0
    %370 = vmatprep.subr.mxu0 0.0
    %371 = vmatpush1.msra.mxu0 0.0
    %372 = vmatprep.subr.mxu0 0.0
    %373 = vmatpush1.msra.mxu0 0.0
    %374 = vmatprep.subr.mxu0 0.0
    %375 = vmatpush1.msra.mxu0 0.0
    %376 = vmatprep.subr.mxu0 0.0
    %377 = vmatpush1.msra.mxu0 0.0
    %378 = vmatprep.subr.mxu0 0.0
    %379 = vmatpush1.msra.mxu0 0.0
    %380 = vmatprep.subr.mxu0 0.0
    %381 = vmatpush1.msra.mxu0 0.0
    %382 = vmatprep.subr.mxu0 0.0
    %383 = vmatpush1.msra.mxu0 0.0
    %384 = vmatprep.subr.mxu0 0.0
    %385 = vmatpush1.msra.mxu0 0.0
    %386 = vmatprep.subr.mxu0 0.0
    %387 = vmatpush1.msra.mxu0 0.0
    %388 = vmatprep.subr.mxu0 0.0
    %389 = vmatpush1.msra.mxu0 0.0
    %390 = vmatprep.subr.mxu0 0.0
    %391 = vmatpush1.msra.mxu0 0.0
    %392 = vmatprep.subr.mxu0 0.0
    %393 = vmatpush1.msra.mxu0 0.0
    %394 = vmatprep.subr.mxu0 0.0
    %395 = vmatpush1.msra.mxu0 0.0
    %396 = vmatprep.subr.mxu0 0.0
    %397 = vmatpush1.msra.mxu0 0.0
    %398 = vmatprep.subr.mxu0 0.0
    %399 = vmatpush1.msra.mxu0 0.0
    %400 = vmatprep.subr.mxu0 0.0
    %401 = vmatpush1.msra.mxu0 0.0
    %402 = vmatprep.subr.mxu0 0.0
    %403 = vmatpush1.msra.mxu0 0.0
    %404 = vmatprep.subr.mxu0 0.0
    %405 = vmatpush1.msra.mxu0 0.0
    %406 = vmatprep.subr.mxu0 0.0
    %407 = vmatpush1.msra.mxu0 0.0
    %408 = vmatprep.subr.mxu0 0.0
    %409 = vmatpush1.msra.mxu0 0.0
    %410 = vmatprep.subr.mxu0 0.0
    %411 = vmatpush1.msra.mxu0 0.0
    %412 = vmatprep.mubr.f32.mxu0 0.0
    %413 = vmatmul.mubr.f32.gmra.mrb[0].mxu0 %v346
    %v414 = vpop.f32.mrb[0].mxu0
    %v415 = vadd.f32 0.0, %v414
    %v416 = vpop.f32.mrb[0].mxu0
    %v417 = vadd.f32 0.0, %v416
    %418 = vdwg.mxu0
    %v420 = vrot.slane %v415, 7
    %v423 = vadd.f32 %v156, %v420
    %v424 = vadd.f32 %v161, %v415
    %v425 = vxor.u32 %v423, 2147483648
    %v426 = vxor.u32 %v424, 2147483648
    %v427 = vmul.f32 %v425, 1.442695
    %v428 = vpow.pop %v427
    %v429 = vmul.f32 %v426, 1.442695
    %v430 = vpow.pop %v429
    %v431 = vadd.f32 %v428, 1.0
    %v432 = vadd.f32 %v430, 1.0
    %v433 = vrcp.pop %v431
    %v434 = vmul.f32 1.0, %v433
    %v435 = vrcp.pop %v432
    %v436 = vmul.f32 1.0, %v435
    %v437 = vtanh.pop %v423
    %v438 = vtanh.pop %v424
    %v441 = vrot.slane %v434, 1
    %v442 = vsel %vm211, %v436, %v441
    %v446 = vrot.slane %v437, 1
    %v447 = vsel %vm211, %v438, %v446
    %v449 = vsel %vm193, %v442, %v447
    %v450 = vmul.f32 %v449, %v230
    %452 = vrot.lane.b32.xlu0 %v449, 32
    %v453 = vpop.permute.xlu0 %452
    %v455 = vmul.f32 %v449, %v453
    %457 = vrot.lane.b32.xlu0 %v455, 32
    %v458 = vpop.permute.xlu0 %457
    %v460 = vadd.f32 %v450, %v458
    %v461 = vtanh.pop %v460
    %463 = vrot.lane.b32.xlu0 %v461, 32
    %v464 = vpop.permute.xlu0 %463
    %v466 = vmul.f32 %v449, %v464
    %468 = vrot.lane.b32.xlu0 %v466, 64
    %v469 = vpop.permute.xlu0 %468
    %v470 = vsel %vm240, %v469, 0
    %472 = vmatprep.subr.mxu0 0.0
    %473 = vmatpush1.msra.mxu0 %v180
    %474 = vmatprep.subr.mxu0 0.0
    %475 = vmatpush1.msra.mxu0 %v181
    %476 = vmatprep.subr.mxu0 0.0
    %477 = vmatpush1.msra.mxu0 %v182
    %478 = vmatprep.subr.mxu0 0.0
    %479 = vmatpush1.msra.mxu0 %v183
    %480 = vmatprep.subr.mxu0 0.0
    %481 = vmatpush1.msra.mxu0 0.0
    %482 = vmatprep.subr.mxu0 0.0
    %483 = vmatpush1.msra.mxu0 0.0
    %484 = vmatprep.subr.mxu0 0.0
    %485 = vmatpush1.msra.mxu0 0.0
    %486 = vmatprep.subr.mxu0 0.0
    %487 = vmatpush1.msra.mxu0 0.0
    %488 = vmatprep.subr.mxu0 0.0
    %489 = vmatpush1.msra.mxu0 0.0
    %490 = vmatprep.subr.mxu0 0.0
    %491 = vmatpush1.msra.mxu0 0.0
    %492 = vmatprep.subr.mxu0 0.0
    %493 = vmatpush1.msra.mxu0 0.0
    %494 = vmatprep.subr.mxu0 0.0
    %495 = vmatpush1.msra.mxu0 0.0
    %496 = vmatprep.subr.mxu0 0.0
    %497 = vmatpush1.msra.mxu0 0.0
    %498 = vmatprep.subr.mxu0 0.0
    %499 = vmatpush1.msra.mxu0 0.0
    %500 = vmatprep.subr.mxu0 0.0
    %501 = vmatpush1.msra.mxu0 0.0
    %502 = vmatprep.subr.mxu0 0.0
    %503 = vmatpush1.msra.mxu0 0.0
    %504 = vmatprep.subr.mxu0 0.0
    %505 = vmatpush1.msra.mxu0 0.0
    %506 = vmatprep.subr.mxu0 0.0
    %507 = vmatpush1.msra.mxu0 0.0
    %508 = vmatprep.subr.mxu0 0.0
    %509 = vmatpush1.msra.mxu0 0.0
    %510 = vmatprep.subr.mxu0 0.0
    %511 = vmatpush1.msra.mxu0 0.0
    %512 = vmatprep.subr.mxu0 0.0
    %513 = vmatpush1.msra.mxu0 0.0
    %514 = vmatprep.subr.mxu0 0.0
    %515 = vmatpush1.msra.mxu0 0.0
    %516 = vmatprep.subr.mxu0 0.0
    %517 = vmatpush1.msra.mxu0 0.0
    %518 = vmatprep.subr.mxu0 0.0
    %519 = vmatpush1.msra.mxu0 0.0
    %520 = vmatprep.subr.mxu0 0.0
    %521 = vmatpush1.msra.mxu0 0.0
    %522 = vmatprep.subr.mxu0 0.0
    %523 = vmatpush1.msra.mxu0 0.0
    %524 = vmatprep.subr.mxu0 0.0
    %525 = vmatpush1.msra.mxu0 0.0
    %526 = vmatprep.subr.mxu0 0.0
    %527 = vmatpush1.msra.mxu0 0.0
    %528 = vmatprep.subr.mxu0 0.0
    %529 = vmatpush1.msra.mxu0 0.0
    %530 = vmatprep.subr.mxu0 0.0
    %531 = vmatpush1.msra.mxu0 0.0
    %532 = vmatprep.subr.mxu0 0.0
    %533 = vmatpush1.msra.mxu0 0.0
    %534 = vmatprep.subr.mxu0 0.0
    %535 = vmatpush1.msra.mxu0 0.0
    %536 = vmatprep.mubr.f32.mxu0 0.0
    %537 = vmatmul.mubr.f32.gmra.mrb[0].mxu0 %v470
    %v538 = vpop.f32.mrb[0].mxu0
    %v539 = vadd.f32 %v417, %v538
    %v540 = vpop.f32.mrb[0].mxu0
    %541 = vdwg.mxu0
    %v542 = vadd.f32 %v539, %v189
    %v543 = vxor.u32 %v542, 2147483648
    %v544 = vmul.f32 %v543, 1.442695
    %v545 = vpow.pop %v544
    %v546 = vadd.f32 %v545, 1.0
    %v547 = vrcp.pop %v546
    %v548 = vmul.f32 1.0, %v547
    %v549 = vtanh.pop %v542
    %v550 = vsel %vm193, %v548, %v549
    %v551 = vmul.f32 %v550, %v331
    %553 = vrot.lane.b32.xlu0 %v550, 32
    %v554 = vpop.permute.xlu0 %553
    %v556 = vmul.f32 %v550, %v554
    %558 = vrot.lane.b32.xlu0 %v556, 32
    %v559 = vpop.permute.xlu0 %558
    %v561 = vadd.f32 %v551, %v559
    %v562 = vtanh.pop %v561
    %564 = vrot.lane.b32.xlu0 %v562, 32
    %v565 = vpop.permute.xlu0 %564
    %v567 = vmul.f32 %v550, %v565
    %570 = vrot.lane.b32.xlu0 %v567, 96
    %v571 = vpop.permute.xlu0 %570
    %v573 = vsel %vm240, %v469, %v571
    %v575 = vsel %vm344, %v573, 0
    %577 = vmatprep.subr.mxu0 %v165
    %578 = vmatpush1.msra.mxu0 %v164
    %579 = vmatprep.subr.mxu0 %v167
    %580 = vmatpush1.msra.mxu0 %v166
    %581 = vmatprep.subr.mxu0 %v169
    %582 = vmatpush1.msra.mxu0 %v168
    %583 = vmatprep.subr.mxu0 %v171
    %584 = vmatpush1.msra.mxu0 %v170
    %585 = vmatprep.subr.mxu0 %v173
    %586 = vmatpush1.msra.mxu0 %v172
    %587 = vmatprep.subr.mxu0 %v175
    %588 = vmatpush1.msra.mxu0 %v174
    %589 = vmatprep.subr.mxu0 %v177
    %590 = vmatpush1.msra.mxu0 %v176
    %591 = vmatprep.subr.mxu0 %v179
    %592 = vmatpush1.msra.mxu0 %v178
    %593 = vmatprep.subr.mxu0 0.0
    %594 = vmatpush1.msra.mxu0 0.0
    %595 = vmatprep.subr.mxu0 0.0
    %596 = vmatpush1.msra.mxu0 0.0
    %597 = vmatprep.subr.mxu0 0.0
    %598 = vmatpush1.msra.mxu0 0.0
    %599 = vmatprep.subr.mxu0 0.0
    %600 = vmatpush1.msra.mxu0 0.0
    %601 = vmatprep.subr.mxu0 0.0
    %602 = vmatpush1.msra.mxu0 0.0
    %603 = vmatprep.subr.mxu0 0.0
    %604 = vmatpush1.msra.mxu0 0.0
    %605 = vmatprep.subr.mxu0 0.0
    %606 = vmatpush1.msra.mxu0 0.0
    %607 = vmatprep.subr.mxu0 0.0
    %608 = vmatpush1.msra.mxu0 0.0
    %609 = vmatprep.subr.mxu0 0.0
    %610 = vmatpush1.msra.mxu0 0.0
    %611 = vmatprep.subr.mxu0 0.0
    %612 = vmatpush1.msra.mxu0 0.0
    %613 = vmatprep.subr.mxu0 0.0
    %614 = vmatpush1.msra.mxu0 0.0
    %615 = vmatprep.subr.mxu0 0.0
    %616 = vmatpush1.msra.mxu0 0.0
    %617 = vmatprep.subr.mxu0 0.0
    %618 = vmatpush1.msra.mxu0 0.0
    %619 = vmatprep.subr.mxu0 0.0
    %620 = vmatpush1.msra.mxu0 0.0
    %621 = vmatprep.subr.mxu0 0.0
    %622 = vmatpush1.msra.mxu0 0.0
    %623 = vmatprep.subr.mxu0 0.0
    %624 = vmatpush1.msra.mxu0 0.0
    %625 = vmatprep.subr.mxu0 0.0
    %626 = vmatpush1.msra.mxu0 0.0
    %627 = vmatprep.subr.mxu0 0.0
    %628 = vmatpush1.msra.mxu0 0.0
    %629 = vmatprep.subr.mxu0 0.0
    %630 = vmatpush1.msra.mxu0 0.0
    %631 = vmatprep.subr.mxu0 0.0
    %632 = vmatpush1.msra.mxu0 0.0
    %633 = vmatprep.subr.mxu0 0.0
    %634 = vmatpush1.msra.mxu0 0.0
    %635 = vmatprep.subr.mxu0 0.0
    %636 = vmatpush1.msra.mxu0 0.0
    %637 = vmatprep.subr.mxu0 0.0
    %638 = vmatpush1.msra.mxu0 0.0
    %639 = vmatprep.subr.mxu0 0.0
    %640 = vmatpush1.msra.mxu0 0.0
    %641 = vmatprep.mubr.f32.mxu0 0.0
    %642 = vmatmul.mubr.f32.gmra.mrb[0].mxu0 %v575
    %v643 = vpop.f32.mrb[0].mxu0
    %v644 = vadd.f32 0.0, %v643
    %v645 = vpop.f32.mrb[0].mxu0
    %v646 = vadd.f32 0.0, %v645
    %647 = vdwg.mxu0
    %v649 = vrot.slane %v644, 6
    %v650 = vrot.slane %v644, 7
    %v653 = vadd.f32 %v156, %v649
    %v654 = vadd.f32 %v161, %v650
    %v655 = vxor.u32 %v653, 2147483648
    %v656 = vxor.u32 %v654, 2147483648
    %v657 = vmul.f32 %v655, 1.442695
    %v658 = vpow.pop %v657
    %v659 = vmul.f32 %v656, 1.442695
    %v660 = vpow.pop %v659
    %v661 = vadd.f32 %v658, 1.0
    %v662 = vadd.f32 %v660, 1.0
    %v663 = vrcp.pop %v661
    %v664 = vmul.f32 1.0, %v663
    %v665 = vrcp.pop %v662
    %v666 = vmul.f32 1.0, %v665
    %v667 = vtanh.pop %v653
    %v668 = vtanh.pop %v654
    %v671 = vrot.slane %v664, 2
    %v672 = vrot.slane %v666, 1
    %v673 = vsel %vm211, %v672, %v671
    %v677 = vrot.slane %v667, 2
    %v678 = vrot.slane %v668, 1
    %v679 = vsel %vm211, %v678, %v677
    %v681 = vsel %vm193, %v673, %v679
    %v682 = vmul.f32 %v681, %v460
    %684 = vrot.lane.b32.xlu0 %v681, 32
    %v685 = vpop.permute.xlu0 %684
    %v687 = vmul.f32 %v681, %v685
    %689 = vrot.lane.b32.xlu0 %v687, 32
    %v690 = vpop.permute.xlu0 %689
    %v692 = vadd.f32 %v682, %v690
    %v693 = vtanh.pop %v692
    %695 = vrot.lane.b32.xlu0 %v693, 32
    %v696 = vpop.permute.xlu0 %695
    %v698 = vmul.f32 %v681, %v696
    %700 = vrot.lane.b32.xlu0 %v698, 64
    %v701 = vpop.permute.xlu0 %700
    %v702 = vsel %vm240, %v701, 0
    %704 = vmatprep.subr.mxu0 0.0
    %705 = vmatpush1.msra.mxu0 %v180
    %706 = vmatprep.subr.mxu0 0.0
    %707 = vmatpush1.msra.mxu0 %v181
    %708 = vmatprep.subr.mxu0 0.0
    %709 = vmatpush1.msra.mxu0 %v182
    %710 = vmatprep.subr.mxu0 0.0
    %711 = vmatpush1.msra.mxu0 %v183
    %712 = vmatprep.subr.mxu0 0.0
    %713 = vmatpush1.msra.mxu0 0.0
    %714 = vmatprep.subr.mxu0 0.0
    %715 = vmatpush1.msra.mxu0 0.0
    %716 = vmatprep.subr.mxu0 0.0
    %717 = vmatpush1.msra.mxu0 0.0
    %718 = vmatprep.subr.mxu0 0.0
    %719 = vmatpush1.msra.mxu0 0.0
    %720 = vmatprep.subr.mxu0 0.0
    %721 = vmatpush1.msra.mxu0 0.0
    %722 = vmatprep.subr.mxu0 0.0
    %723 = vmatpush1.msra.mxu0 0.0
    %724 = vmatprep.subr.mxu0 0.0
    %725 = vmatpush1.msra.mxu0 0.0
    %726 = vmatprep.subr.mxu0 0.0
    %727 = vmatpush1.msra.mxu0 0.0
    %728 = vmatprep.subr.mxu0 0.0
    %729 = vmatpush1.msra.mxu0 0.0
    %730 = vmatprep.subr.mxu0 0.0
    %731 = vmatpush1.msra.mxu0 0.0
    %732 = vmatprep.subr.mxu0 0.0
    %733 = vmatpush1.msra.mxu0 0.0
    %734 = vmatprep.subr.mxu0 0.0
    %735 = vmatpush1.msra.mxu0 0.0
    %736 = vmatprep.subr.mxu0 0.0
    %737 = vmatpush1.msra.mxu0 0.0
    %738 = vmatprep.subr.mxu0 0.0
    %739 = vmatpush1.msra.mxu0 0.0
    %740 = vmatprep.subr.mxu0 0.0
    %741 = vmatpush1.msra.mxu0 0.0
    %742 = vmatprep.subr.mxu0 0.0
    %743 = vmatpush1.msra.mxu0 0.0
    %744 = vmatprep.subr.mxu0 0.0
    %745 = vmatpush1.msra.mxu0 0.0
    %746 = vmatprep.subr.mxu0 0.0
    %747 = vmatpush1.msra.mxu0 0.0
    %748 = vmatprep.subr.mxu0 0.0
    %749 = vmatpush1.msra.mxu0 0.0
    %750 = vmatprep.subr.mxu0 0.0
    %751 = vmatpush1.msra.mxu0 0.0
    %752 = vmatprep.subr.mxu0 0.0
    %753 = vmatpush1.msra.mxu0 0.0
    %754 = vmatprep.subr.mxu0 0.0
    %755 = vmatpush1.msra.mxu0 0.0
    %756 = vmatprep.subr.mxu0 0.0
    %757 = vmatpush1.msra.mxu0 0.0
    %758 = vmatprep.subr.mxu0 0.0
    %759 = vmatpush1.msra.mxu0 0.0
    %760 = vmatprep.subr.mxu0 0.0
    %761 = vmatpush1.msra.mxu0 0.0
    %762 = vmatprep.subr.mxu0 0.0
    %763 = vmatpush1.msra.mxu0 0.0
    %764 = vmatprep.subr.mxu0 0.0
    %765 = vmatpush1.msra.mxu0 0.0
    %766 = vmatprep.subr.mxu0 0.0
    %767 = vmatpush1.msra.mxu0 0.0
    %768 = vmatprep.mubr.f32.mxu0 0.0
    %769 = vmatmul.mubr.f32.gmra.mrb[0].mxu0 %v702
    %v770 = vpop.f32.mrb[0].mxu0
    %v771 = vadd.f32 %v646, %v770
    %v772 = vpop.f32.mrb[0].mxu0
    %773 = vdwg.mxu0
    %v774 = vadd.f32 %v771, %v189
    %v775 = vxor.u32 %v774, 2147483648
    %v776 = vmul.f32 %v775, 1.442695
    %v777 = vpow.pop %v776
    %v778 = vadd.f32 %v777, 1.0
    %v779 = vrcp.pop %v778
    %v780 = vmul.f32 1.0, %v779
    %v781 = vtanh.pop %v774
    %v782 = vsel %vm193, %v780, %v781
    %v783 = vmul.f32 %v782, %v561
    %785 = vrot.lane.b32.xlu0 %v782, 32
    %v786 = vpop.permute.xlu0 %785
    %v788 = vmul.f32 %v782, %v786
    %790 = vrot.lane.b32.xlu0 %v788, 32
    %v791 = vpop.permute.xlu0 %790
    %v793 = vadd.f32 %v783, %v791
    %v794 = vtanh.pop %v793
    %796 = vrot.lane.b32.xlu0 %v794, 32
    %v797 = vpop.permute.xlu0 %796
    %v799 = vmul.f32 %v782, %v797
    %802 = vrot.lane.b32.xlu0 %v799, 96
    %v803 = vpop.permute.xlu0 %802
    %v805 = vsel %vm240, %v701, %v803
    %v807 = vsel %vm344, %v805, 0
    %809 = vmatprep.subr.mxu0 %v165
    %810 = vmatpush1.msra.mxu0 %v164
    %811 = vmatprep.subr.mxu0 %v167
    %812 = vmatpush1.msra.mxu0 %v166
    %813 = vmatprep.subr.mxu0 %v169
    %814 = vmatpush1.msra.mxu0 %v168
    %815 = vmatprep.subr.mxu0 %v171
    %816 = vmatpush1.msra.mxu0 %v170
    %817 = vmatprep.subr.mxu0 %v173
    %818 = vmatpush1.msra.mxu0 %v172
    %819 = vmatprep.subr.mxu0 %v175
    %820 = vmatpush1.msra.mxu0 %v174
    %821 = vmatprep.subr.mxu0 %v177
    %822 = vmatpush1.msra.mxu0 %v176
    %823 = vmatprep.subr.mxu0 %v179
    %824 = vmatpush1.msra.mxu0 %v178
    %825 = vmatprep.subr.mxu0 0.0
    %826 = vmatpush1.msra.mxu0 0.0
    %827 = vmatprep.subr.mxu0 0.0
    %828 = vmatpush1.msra.mxu0 0.0
    %829 = vmatprep.subr.mxu0 0.0
    %830 = vmatpush1.msra.mxu0 0.0
    %831 = vmatprep.subr.mxu0 0.0
    %832 = vmatpush1.msra.mxu0 0.0
    %833 = vmatprep.subr.mxu0 0.0
    %834 = vmatpush1.msra.mxu0 0.0
    %835 = vmatprep.subr.mxu0 0.0
    %836 = vmatpush1.msra.mxu0 0.0
    %837 = vmatprep.subr.mxu0 0.0
    %838 = vmatpush1.msra.mxu0 0.0
    %839 = vmatprep.subr.mxu0 0.0
    %840 = vmatpush1.msra.mxu0 0.0
    %841 = vmatprep.subr.mxu0 0.0
    %842 = vmatpush1.msra.mxu0 0.0
    %843 = vmatprep.subr.mxu0 0.0
    %844 = vmatpush1.msra.mxu0 0.0
    %845 = vmatprep.subr.mxu0 0.0
    %846 = vmatpush1.msra.mxu0 0.0
    %847 = vmatprep.subr.mxu0 0.0
    %848 = vmatpush1.msra.mxu0 0.0
    %849 = vmatprep.subr.mxu0 0.0
    %850 = vmatpush1.msra.mxu0 0.0
    %851 = vmatprep.subr.mxu0 0.0
    %852 = vmatpush1.msra.mxu0 0.0
    %853 = vmatprep.subr.mxu0 0.0
    %854 = vmatpush1.msra.mxu0 0.0
    %855 = vmatprep.subr.mxu0 0.0
    %856 = vmatpush1.msra.mxu0 0.0
    %857 = vmatprep.subr.mxu0 0.0
    %858 = vmatpush1.msra.mxu0 0.0
    %859 = vmatprep.subr.mxu0 0.0
    %860 = vmatpush1.msra.mxu0 0.0
    %861 = vmatprep.subr.mxu0 0.0
    %862 = vmatpush1.msra.mxu0 0.0
    %863 = vmatprep.subr.mxu0 0.0
    %864 = vmatpush1.msra.mxu0 0.0
    %865 = vmatprep.subr.mxu0 0.0
    %866 = vmatpush1.msra.mxu0 0.0
    %867 = vmatprep.subr.mxu0 0.0
    %868 = vmatpush1.msra.mxu0 0.0
    %869 = vmatprep.subr.mxu0 0.0
    %870 = vmatpush1.msra.mxu0 0.0
    %871 = vmatprep.subr.mxu0 0.0
    %872 = vmatpush1.msra.mxu0 0.0
    %873 = vmatprep.mubr.f32.mxu0 0.0
    %874 = vmatmul.mubr.f32.gmra.mrb[0].mxu0 %v807
    %v875 = vpop.f32.mrb[0].mxu0
    %v876 = vadd.f32 0.0, %v875
    %v877 = vpop.f32.mrb[0].mxu0
    %v878 = vadd.f32 0.0, %v877
    %879 = vdwg.mxu0
    %v881 = vrot.slane %v876, 5
    %v882 = vrot.slane %v876, 6
    %v885 = vadd.f32 %v156, %v881
    %v886 = vadd.f32 %v161, %v882
    %v887 = vxor.u32 %v885, 2147483648
    %v888 = vxor.u32 %v886, 2147483648
    %v889 = vmul.f32 %v887, 1.442695
    %v890 = vpow.pop %v889
    %v891 = vmul.f32 %v888, 1.442695
    %v892 = vpow.pop %v891
    %v893 = vadd.f32 %v890, 1.0
    %v894 = vadd.f32 %v892, 1.0
    %v895 = vrcp.pop %v893
    %v896 = vmul.f32 1.0, %v895
    %v897 = vrcp.pop %v894
    %v898 = vmul.f32 1.0, %v897
    %v899 = vtanh.pop %v885
    %v900 = vtanh.pop %v886
    %v903 = vrot.slane %v896, 3
    %v904 = vrot.slane %v898, 2
    %v905 = vsel %vm211, %v904, %v903
    %v909 = vrot.slane %v899, 3
    %v910 = vrot.slane %v900, 2
    %v911 = vsel %vm211, %v910, %v909
    %v913 = vsel %vm193, %v905, %v911
    %v914 = vmul.f32 %v913, %v692
    %916 = vrot.lane.b32.xlu0 %v913, 32
    %v917 = vpop.permute.xlu0 %916
    %v919 = vmul.f32 %v913, %v917
    %921 = vrot.lane.b32.xlu0 %v919, 32
    %v922 = vpop.permute.xlu0 %921
    %v924 = vadd.f32 %v914, %v922
    %v925 = vtanh.pop %v924
    %927 = vrot.lane.b32.xlu0 %v925, 32
    %v928 = vpop.permute.xlu0 %927
    %v930 = vmul.f32 %v913, %v928
    %932 = vrot.lane.b32.xlu0 %v930, 64
    %v933 = vpop.permute.xlu0 %932
    %v934 = vsel %vm240, %v933, 0
    %936 = vmatprep.subr.mxu0 0.0
    %937 = vmatpush1.msra.mxu0 %v180
    %938 = vmatprep.subr.mxu0 0.0
    %939 = vmatpush1.msra.mxu0 %v181
    %940 = vmatprep.subr.mxu0 0.0
    %941 = vmatpush1.msra.mxu0 %v182
    %942 = vmatprep.subr.mxu0 0.0
    %943 = vmatpush1.msra.mxu0 %v183
    %944 = vmatprep.subr.mxu0 0.0
    %945 = vmatpush1.msra.mxu0 0.0
    %946 = vmatprep.subr.mxu0 0.0
    %947 = vmatpush1.msra.mxu0 0.0
    %948 = vmatprep.subr.mxu0 0.0
    %949 = vmatpush1.msra.mxu0 0.0
    %950 = vmatprep.subr.mxu0 0.0
    %951 = vmatpush1.msra.mxu0 0.0
    %952 = vmatprep.subr.mxu0 0.0
    %953 = vmatpush1.msra.mxu0 0.0
    %954 = vmatprep.subr.mxu0 0.0
    %955 = vmatpush1.msra.mxu0 0.0
    %956 = vmatprep.subr.mxu0 0.0
    %957 = vmatpush1.msra.mxu0 0.0
    %958 = vmatprep.subr.mxu0 0.0
    %959 = vmatpush1.msra.mxu0 0.0
    %960 = vmatprep.subr.mxu0 0.0
    %961 = vmatpush1.msra.mxu0 0.0
    %962 = vmatprep.subr.mxu0 0.0
    %963 = vmatpush1.msra.mxu0 0.0
    %964 = vmatprep.subr.mxu0 0.0
    %965 = vmatpush1.msra.mxu0 0.0
    %966 = vmatprep.subr.mxu0 0.0
    %967 = vmatpush1.msra.mxu0 0.0
    %968 = vmatprep.subr.mxu0 0.0
    %969 = vmatpush1.msra.mxu0 0.0
    %970 = vmatprep.subr.mxu0 0.0
    %971 = vmatpush1.msra.mxu0 0.0
    %972 = vmatprep.subr.mxu0 0.0
    %973 = vmatpush1.msra.mxu0 0.0
    %974 = vmatprep.subr.mxu0 0.0
    %975 = vmatpush1.msra.mxu0 0.0
    %976 = vmatprep.subr.mxu0 0.0
    %977 = vmatpush1.msra.mxu0 0.0
    %978 = vmatprep.subr.mxu0 0.0
    %979 = vmatpush1.msra.mxu0 0.0
    %980 = vmatprep.subr.mxu0 0.0
    %981 = vmatpush1.msra.mxu0 0.0
    %982 = vmatprep.subr.mxu0 0.0
    %983 = vmatpush1.msra.mxu0 0.0
    %984 = vmatprep.subr.mxu0 0.0
    %985 = vmatpush1.msra.mxu0 0.0
    %986 = vmatprep.subr.mxu0 0.0
    %987 = vmatpush1.msra.mxu0 0.0
    %988 = vmatprep.subr.mxu0 0.0
    %989 = vmatpush1.msra.mxu0 0.0
    %990 = vmatprep.subr.mxu0 0.0
    %991 = vmatpush1.msra.mxu0 0.0
    %992 = vmatprep.subr.mxu0 0.0
    %993 = vmatpush1.msra.mxu0 0.0
    %994 = vmatprep.subr.mxu0 0.0
    %995 = vmatpush1.msra.mxu0 0.0
    %996 = vmatprep.subr.mxu0 0.0
    %997 = vmatpush1.msra.mxu0 0.0
    %998 = vmatprep.subr.mxu0 0.0
    %999 = vmatpush1.msra.mxu0 0.0
    %1000 = vmatprep.mubr.f32.mxu0 0.0
    %1001 = vmatmul.mubr.f32.gmra.mrb[0].mxu0 %v934
    %v1002 = vpop.f32.mrb[0].mxu0
    %v1003 = vadd.f32 %v878, %v1002
    %v1004 = vpop.f32.mrb[0].mxu0
    %1005 = vdwg.mxu0
    %v1006 = vadd.f32 %v1003, %v189
    %v1007 = vxor.u32 %v1006, 2147483648
    %v1008 = vmul.f32 %v1007, 1.442695
    %v1009 = vpow.pop %v1008
    %v1010 = vadd.f32 %v1009, 1.0
    %v1011 = vrcp.pop %v1010
    %v1012 = vmul.f32 1.0, %v1011
    %v1013 = vtanh.pop %v1006
    %v1014 = vsel %vm193, %v1012, %v1013
    %v1015 = vmul.f32 %v1014, %v793
    %1017 = vrot.lane.b32.xlu0 %v1014, 32
    %v1018 = vpop.permute.xlu0 %1017
    %v1020 = vmul.f32 %v1014, %v1018
    %1022 = vrot.lane.b32.xlu0 %v1020, 32
    %v1023 = vpop.permute.xlu0 %1022
    %v1025 = vadd.f32 %v1015, %v1023
    %v1026 = vtanh.pop %v1025
    %1028 = vrot.lane.b32.xlu0 %v1026, 32
    %v1029 = vpop.permute.xlu0 %1028
    %v1031 = vmul.f32 %v1014, %v1029
    %1034 = vrot.lane.b32.xlu0 %v1031, 96
    %v1035 = vpop.permute.xlu0 %1034
    %v1037 = vsel %vm240, %v933, %v1035
    %v1039 = vsel %vm344, %v1037, 0
    %1041 = vmatprep.subr.mxu0 %v165
    %1042 = vmatpush1.msra.mxu0 %v164
    %1043 = vmatprep.subr.mxu0 %v167
    %1044 = vmatpush1.msra.mxu0 %v166
    %1045 = vmatprep.subr.mxu0 %v169
    %1046 = vmatpush1.msra.mxu0 %v168
    %1047 = vmatprep.subr.mxu0 %v171
    %1048 = vmatpush1.msra.mxu0 %v170
    %1049 = vmatprep.subr.mxu0 %v173
    %1050 = vmatpush1.msra.mxu0 %v172
    %1051 = vmatprep.subr.mxu0 %v175
    %1052 = vmatpush1.msra.mxu0 %v174
    %1053 = vmatprep.subr.mxu0 %v177
    %1054 = vmatpush1.msra.mxu0 %v176
    %1055 = vmatprep.subr.mxu0 %v179
    %1056 = vmatpush1.msra.mxu0 %v178
    %1057 = vmatprep.subr.mxu0 0.0
    %1058 = vmatpush1.msra.mxu0 0.0
    %1059 = vmatprep.subr.mxu0 0.0
    %1060 = vmatpush1.msra.mxu0 0.0
    %1061 = vmatprep.subr.mxu0 0.0
    %1062 = vmatpush1.msra.mxu0 0.0
    %1063 = vmatprep.subr.mxu0 0.0
    %1064 = vmatpush1.msra.mxu0 0.0
    %1065 = vmatprep.subr.mxu0 0.0
    %1066 = vmatpush1.msra.mxu0 0.0
    %1067 = vmatprep.subr.mxu0 0.0
    %1068 = vmatpush1.msra.mxu0 0.0
    %1069 = vmatprep.subr.mxu0 0.0
    %1070 = vmatpush1.msra.mxu0 0.0
    %1071 = vmatprep.subr.mxu0 0.0
    %1072 = vmatpush1.msra.mxu0 0.0
    %1073 = vmatprep.subr.mxu0 0.0
    %1074 = vmatpush1.msra.mxu0 0.0
    %1075 = vmatprep.subr.mxu0 0.0
    %1076 = vmatpush1.msra.mxu0 0.0
    %1077 = vmatprep.subr.mxu0 0.0
    %1078 = vmatpush1.msra.mxu0 0.0
    %1079 = vmatprep.subr.mxu0 0.0
    %1080 = vmatpush1.msra.mxu0 0.0
    %1081 = vmatprep.subr.mxu0 0.0
    %1082 = vmatpush1.msra.mxu0 0.0
    %1083 = vmatprep.subr.mxu0 0.0
    %1084 = vmatpush1.msra.mxu0 0.0
    %1085 = vmatprep.subr.mxu0 0.0
    %1086 = vmatpush1.msra.mxu0 0.0
    %1087 = vmatprep.subr.mxu0 0.0
    %1088 = vmatpush1.msra.mxu0 0.0
    %1089 = vmatprep.subr.mxu0 0.0
    %1090 = vmatpush1.msra.mxu0 0.0
    %1091 = vmatprep.subr.mxu0 0.0
    %1092 = vmatpush1.msra.mxu0 0.0
    %1093 = vmatprep.subr.mxu0 0.0
    %1094 = vmatpush1.msra.mxu0 0.0
    %1095 = vmatprep.subr.mxu0 0.0
    %1096 = vmatpush1.msra.mxu0 0.0
    %1097 = vmatprep.subr.mxu0 0.0
    %1098 = vmatpush1.msra.mxu0 0.0
    %1099 = vmatprep.subr.mxu0 0.0
    %1100 = vmatpush1.msra.mxu0 0.0
    %1101 = vmatprep.subr.mxu0 0.0
    %1102 = vmatpush1.msra.mxu0 0.0
    %1103 = vmatprep.subr.mxu0 0.0
    %1104 = vmatpush1.msra.mxu0 0.0
    %1105 = vmatprep.mubr.f32.mxu0 0.0
    %1106 = vmatmul.mubr.f32.gmra.mrb[0].mxu0 %v1039
    %v1107 = vpop.f32.mrb[0].mxu0
    %v1108 = vadd.f32 0.0, %v1107
    %v1109 = vpop.f32.mrb[0].mxu0
    %v1110 = vadd.f32 0.0, %v1109
    %1111 = vdwg.mxu0
    %v1113 = vrot.slane %v1108, 4
    %v1114 = vrot.slane %v1108, 5
    %v1117 = vadd.f32 %v156, %v1113
    %v1118 = vadd.f32 %v161, %v1114
    %v1119 = vxor.u32 %v1117, 2147483648
    %v1120 = vxor.u32 %v1118, 2147483648
    %v1121 = vmul.f32 %v1119, 1.442695
    %v1122 = vpow.pop %v1121
    %v1123 = vmul.f32 %v1120, 1.442695
    %v1124 = vpow.pop %v1123
    %v1125 = vadd.f32 %v1122, 1.0
    %v1126 = vadd.f32 %v1124, 1.0
    %v1127 = vrcp.pop %v1125
    %v1128 = vmul.f32 1.0, %v1127
    %v1129 = vrcp.pop %v1126
    %v1130 = vmul.f32 1.0, %v1129
    %v1131 = vtanh.pop %v1117
    %v1132 = vtanh.pop %v1118
    %v1135 = vrot.slane %v1128, 4
    %v1136 = vrot.slane %v1130, 3
    %v1137 = vsel %vm211, %v1136, %v1135
    %v1141 = vrot.slane %v1131, 4
    %v1142 = vrot.slane %v1132, 3
    %v1143 = vsel %vm211, %v1142, %v1141
    %v1145 = vsel %vm193, %v1137, %v1143
    %v1146 = vmul.f32 %v1145, %v924
    %1148 = vrot.lane.b32.xlu0 %v1145, 32
    %v1149 = vpop.permute.xlu0 %1148
    %v1151 = vmul.f32 %v1145, %v1149
    %1153 = vrot.lane.b32.xlu0 %v1151, 32
    %v1154 = vpop.permute.xlu0 %1153
    %v1156 = vadd.f32 %v1146, %v1154
    %v1157 = vtanh.pop %v1156
    %1159 = vrot.lane.b32.xlu0 %v1157, 32
    %v1160 = vpop.permute.xlu0 %1159
    %v1162 = vmul.f32 %v1145, %v1160
    %1164 = vrot.lane.b32.xlu0 %v1162, 64
    %v1165 = vpop.permute.xlu0 %1164
    %v1166 = vsel %vm240, %v1165, 0
    %1168 = vmatprep.subr.mxu0 0.0
    %1169 = vmatpush1.msra.mxu0 %v180
    %1170 = vmatprep.subr.mxu0 0.0
    %1171 = vmatpush1.msra.mxu0 %v181
    %1172 = vmatprep.subr.mxu0 0.0
    %1173 = vmatpush1.msra.mxu0 %v182
    %1174 = vmatprep.subr.mxu0 0.0
    %1175 = vmatpush1.msra.mxu0 %v183
    %1176 = vmatprep.subr.mxu0 0.0
    %1177 = vmatpush1.msra.mxu0 0.0
    %1178 = vmatprep.subr.mxu0 0.0
    %1179 = vmatpush1.msra.mxu0 0.0
    %1180 = vmatprep.subr.mxu0 0.0
    %1181 = vmatpush1.msra.mxu0 0.0
    %1182 = vmatprep.subr.mxu0 0.0
    %1183 = vmatpush1.msra.mxu0 0.0
    %1184 = vmatprep.subr.mxu0 0.0
    %1185 = vmatpush1.msra.mxu0 0.0
    %1186 = vmatprep.subr.mxu0 0.0
    %1187 = vmatpush1.msra.mxu0 0.0
    %1188 = vmatprep.subr.mxu0 0.0
    %1189 = vmatpush1.msra.mxu0 0.0
    %1190 = vmatprep.subr.mxu0 0.0
    %1191 = vmatpush1.msra.mxu0 0.0
    %1192 = vmatprep.subr.mxu0 0.0
    %1193 = vmatpush1.msra.mxu0 0.0
    %1194 = vmatprep.subr.mxu0 0.0
    %1195 = vmatpush1.msra.mxu0 0.0
    %1196 = vmatprep.subr.mxu0 0.0
    %1197 = vmatpush1.msra.mxu0 0.0
    %1198 = vmatprep.subr.mxu0 0.0
    %1199 = vmatpush1.msra.mxu0 0.0
    %1200 = vmatprep.subr.mxu0 0.0
    %1201 = vmatpush1.msra.mxu0 0.0
    %1202 = vmatprep.subr.mxu0 0.0
    %1203 = vmatpush1.msra.mxu0 0.0
    %1204 = vmatprep.subr.mxu0 0.0
    %1205 = vmatpush1.msra.mxu0 0.0
    %1206 = vmatprep.subr.mxu0 0.0
    %1207 = vmatpush1.msra.mxu0 0.0
    %1208 = vmatprep.subr.mxu0 0.0
    %1209 = vmatpush1.msra.mxu0 0.0
    %1210 = vmatprep.subr.mxu0 0.0
    %1211 = vmatpush1.msra.mxu0 0.0
    %1212 = vmatprep.subr.mxu0 0.0
    %1213 = vmatpush1.msra.mxu0 0.0
    %1214 = vmatprep.subr.mxu0 0.0
    %1215 = vmatpush1.msra.mxu0 0.0
    %1216 = vmatprep.subr.mxu0 0.0
    %1217 = vmatpush1.msra.mxu0 0.0
    %1218 = vmatprep.subr.mxu0 0.0
    %1219 = vmatpush1.msra.mxu0 0.0
    %1220 = vmatprep.subr.mxu0 0.0
    %1221 = vmatpush1.msra.mxu0 0.0
    %1222 = vmatprep.subr.mxu0 0.0
    %1223 = vmatpush1.msra.mxu0 0.0
    %1224 = vmatprep.subr.mxu0 0.0
    %1225 = vmatpush1.msra.mxu0 0.0
    %1226 = vmatprep.subr.mxu0 0.0
    %1227 = vmatpush1.msra.mxu0 0.0
    %1228 = vmatprep.subr.mxu0 0.0
    %1229 = vmatpush1.msra.mxu0 0.0
    %1230 = vmatprep.subr.mxu0 0.0
    %1231 = vmatpush1.msra.mxu0 0.0
    %1232 = vmatprep.mubr.f32.mxu0 0.0
    %1233 = vmatmul.mubr.f32.gmra.mrb[0].mxu0 %v1166
    %v1234 = vpop.f32.mrb[0].mxu0
    %v1235 = vadd.f32 %v1110, %v1234
    %v1236 = vpop.f32.mrb[0].mxu0
    %1237 = vdwg.mxu0
    %v1238 = vadd.f32 %v1235, %v189
    %v1239 = vxor.u32 %v1238, 2147483648
    %v1240 = vmul.f32 %v1239, 1.442695
    %v1241 = vpow.pop %v1240
    %v1242 = vadd.f32 %v1241, 1.0
    %v1243 = vrcp.pop %v1242
    %v1244 = vmul.f32 1.0, %v1243
    %v1245 = vtanh.pop %v1238
    %v1246 = vsel %vm193, %v1244, %v1245
    %v1247 = vmul.f32 %v1246, %v1025
    %1249 = vrot.lane.b32.xlu0 %v1246, 32
    %v1250 = vpop.permute.xlu0 %1249
    %v1252 = vmul.f32 %v1246, %v1250
    %1254 = vrot.lane.b32.xlu0 %v1252, 32
    %v1255 = vpop.permute.xlu0 %1254
    %v1257 = vadd.f32 %v1247, %v1255
    %v1258 = vtanh.pop %v1257
    %1260 = vrot.lane.b32.xlu0 %v1258, 32
    %v1261 = vpop.permute.xlu0 %1260
    %v1263 = vmul.f32 %v1246, %v1261
    %1266 = vrot.lane.b32.xlu0 %v1263, 96
    %v1267 = vpop.permute.xlu0 %1266
    %v1269 = vsel %vm240, %v1165, %v1267
    %v1271 = vsel %vm344, %v1269, 0
    %1273 = vmatprep.subr.mxu0 %v165
    %1274 = vmatpush1.msra.mxu0 %v164
    %1275 = vmatprep.subr.mxu0 %v167
    %1276 = vmatpush1.msra.mxu0 %v166
    %1277 = vmatprep.subr.mxu0 %v169
    %1278 = vmatpush1.msra.mxu0 %v168
    %1279 = vmatprep.subr.mxu0 %v171
    %1280 = vmatpush1.msra.mxu0 %v170
    %1281 = vmatprep.subr.mxu0 %v173
    %1282 = vmatpush1.msra.mxu0 %v172
    %1283 = vmatprep.subr.mxu0 %v175
    %1284 = vmatpush1.msra.mxu0 %v174
    %1285 = vmatprep.subr.mxu0 %v177
    %1286 = vmatpush1.msra.mxu0 %v176
    %1287 = vmatprep.subr.mxu0 %v179
    %1288 = vmatpush1.msra.mxu0 %v178
    %1289 = vmatprep.subr.mxu0 0.0
    %1290 = vmatpush1.msra.mxu0 0.0
    %1291 = vmatprep.subr.mxu0 0.0
    %1292 = vmatpush1.msra.mxu0 0.0
    %1293 = vmatprep.subr.mxu0 0.0
    %1294 = vmatpush1.msra.mxu0 0.0
    %1295 = vmatprep.subr.mxu0 0.0
    %1296 = vmatpush1.msra.mxu0 0.0
    %1297 = vmatprep.subr.mxu0 0.0
    %1298 = vmatpush1.msra.mxu0 0.0
    %1299 = vmatprep.subr.mxu0 0.0
    %1300 = vmatpush1.msra.mxu0 0.0
    %1301 = vmatprep.subr.mxu0 0.0
    %1302 = vmatpush1.msra.mxu0 0.0
    %1303 = vmatprep.subr.mxu0 0.0
    %1304 = vmatpush1.msra.mxu0 0.0
    %1305 = vmatprep.subr.mxu0 0.0
    %1306 = vmatpush1.msra.mxu0 0.0
    %1307 = vmatprep.subr.mxu0 0.0
    %1308 = vmatpush1.msra.mxu0 0.0
    %1309 = vmatprep.subr.mxu0 0.0
    %1310 = vmatpush1.msra.mxu0 0.0
    %1311 = vmatprep.subr.mxu0 0.0
    %1312 = vmatpush1.msra.mxu0 0.0
    %1313 = vmatprep.subr.mxu0 0.0
    %1314 = vmatpush1.msra.mxu0 0.0
    %1315 = vmatprep.subr.mxu0 0.0
    %1316 = vmatpush1.msra.mxu0 0.0
    %1317 = vmatprep.subr.mxu0 0.0
    %1318 = vmatpush1.msra.mxu0 0.0
    %1319 = vmatprep.subr.mxu0 0.0
    %1320 = vmatpush1.msra.mxu0 0.0
    %1321 = vmatprep.subr.mxu0 0.0
    %1322 = vmatpush1.msra.mxu0 0.0
    %1323 = vmatprep.subr.mxu0 0.0
    %1324 = vmatpush1.msra.mxu0 0.0
    %1325 = vmatprep.subr.mxu0 0.0
    %1326 = vmatpush1.msra.mxu0 0.0
    %1327 = vmatprep.subr.mxu0 0.0
    %1328 = vmatpush1.msra.mxu0 0.0
    %1329 = vmatprep.subr.mxu0 0.0
    %1330 = vmatpush1.msra.mxu0 0.0
    %1331 = vmatprep.subr.mxu0 0.0
    %1332 = vmatpush1.msra.mxu0 0.0
    %1333 = vmatprep.subr.mxu0 0.0
    %1334 = vmatpush1.msra.mxu0 0.0
    %1335 = vmatprep.subr.mxu0 0.0
    %1336 = vmatpush1.msra.mxu0 0.0
    %1337 = vmatprep.mubr.f32.mxu0 0.0
    %1338 = vmatmul.mubr.f32.gmra.mrb[0].mxu0 %v1271
    %v1339 = vpop.f32.mrb[0].mxu0
    %v1340 = vadd.f32 0.0, %v1339
    %v1341 = vpop.f32.mrb[0].mxu0
    %v1342 = vadd.f32 0.0, %v1341
    %1343 = vdwg.mxu0
    %v1345 = vrot.slane %v1340, 3
    %v1346 = vrot.slane %v1340, 4
    %v1349 = vadd.f32 %v156, %v1345
    %v1350 = vadd.f32 %v161, %v1346
    %v1351 = vxor.u32 %v1349, 2147483648
    %v1352 = vxor.u32 %v1350, 2147483648
    %v1353 = vmul.f32 %v1351, 1.442695
    %v1354 = vpow.pop %v1353
    %v1355 = vmul.f32 %v1352, 1.442695
    %v1356 = vpow.pop %v1355
    %v1357 = vadd.f32 %v1354, 1.0
    %v1358 = vadd.f32 %v1356, 1.0
    %v1359 = vrcp.pop %v1357
    %v1360 = vmul.f32 1.0, %v1359
    %v1361 = vrcp.pop %v1358
    %v1362 = vmul.f32 1.0, %v1361
    %v1363 = vtanh.pop %v1349
    %v1364 = vtanh.pop %v1350
    %v1367 = vrot.slane %v1360, 5
    %v1368 = vrot.slane %v1362, 4
    %v1369 = vsel %vm211, %v1368, %v1367
    %v1373 = vrot.slane %v1363, 5
    %v1374 = vrot.slane %v1364, 4
    %v1375 = vsel %vm211, %v1374, %v1373
    %v1377 = vsel %vm193, %v1369, %v1375
    %v1378 = vmul.f32 %v1377, %v1156
    %1380 = vrot.lane.b32.xlu0 %v1377, 32
    %v1381 = vpop.permute.xlu0 %1380
    %v1383 = vmul.f32 %v1377, %v1381
    %1385 = vrot.lane.b32.xlu0 %v1383, 32
    %v1386 = vpop.permute.xlu0 %1385
    %v1388 = vadd.f32 %v1378, %v1386
    %v1389 = vtanh.pop %v1388
    %1391 = vrot.lane.b32.xlu0 %v1389, 32
    %v1392 = vpop.permute.xlu0 %1391
    %v1394 = vmul.f32 %v1377, %v1392
    %1396 = vrot.lane.b32.xlu0 %v1394, 64
    %v1397 = vpop.permute.xlu0 %1396
    %v1398 = vsel %vm240, %v1397, 0
    %1400 = vmatprep.subr.mxu0 0.0
    %1401 = vmatpush1.msra.mxu0 %v180
    %1402 = vmatprep.subr.mxu0 0.0
    %1403 = vmatpush1.msra.mxu0 %v181
    %1404 = vmatprep.subr.mxu0 0.0
    %1405 = vmatpush1.msra.mxu0 %v182
    %1406 = vmatprep.subr.mxu0 0.0
    %1407 = vmatpush1.msra.mxu0 %v183
    %1408 = vmatprep.subr.mxu0 0.0
    %1409 = vmatpush1.msra.mxu0 0.0
    %1410 = vmatprep.subr.mxu0 0.0
    %1411 = vmatpush1.msra.mxu0 0.0
    %1412 = vmatprep.subr.mxu0 0.0
    %1413 = vmatpush1.msra.mxu0 0.0
    %1414 = vmatprep.subr.mxu0 0.0
    %1415 = vmatpush1.msra.mxu0 0.0
    %1416 = vmatprep.subr.mxu0 0.0
    %1417 = vmatpush1.msra.mxu0 0.0
    %1418 = vmatprep.subr.mxu0 0.0
    %1419 = vmatpush1.msra.mxu0 0.0
    %1420 = vmatprep.subr.mxu0 0.0
    %1421 = vmatpush1.msra.mxu0 0.0
    %1422 = vmatprep.subr.mxu0 0.0
    %1423 = vmatpush1.msra.mxu0 0.0
    %1424 = vmatprep.subr.mxu0 0.0
    %1425 = vmatpush1.msra.mxu0 0.0
    %1426 = vmatprep.subr.mxu0 0.0
    %1427 = vmatpush1.msra.mxu0 0.0
    %1428 = vmatprep.subr.mxu0 0.0
    %1429 = vmatpush1.msra.mxu0 0.0
    %1430 = vmatprep.subr.mxu0 0.0
    %1431 = vmatpush1.msra.mxu0 0.0
    %1432 = vmatprep.subr.mxu0 0.0
    %1433 = vmatpush1.msra.mxu0 0.0
    %1434 = vmatprep.subr.mxu0 0.0
    %1435 = vmatpush1.msra.mxu0 0.0
    %1436 = vmatprep.subr.mxu0 0.0
    %1437 = vmatpush1.msra.mxu0 0.0
    %1438 = vmatprep.subr.mxu0 0.0
    %1439 = vmatpush1.msra.mxu0 0.0
    %1440 = vmatprep.subr.mxu0 0.0
    %1441 = vmatpush1.msra.mxu0 0.0
    %1442 = vmatprep.subr.mxu0 0.0
    %1443 = vmatpush1.msra.mxu0 0.0
    %1444 = vmatprep.subr.mxu0 0.0
    %1445 = vmatpush1.msra.mxu0 0.0
    %1446 = vmatprep.subr.mxu0 0.0
    %1447 = vmatpush1.msra.mxu0 0.0
    %1448 = vmatprep.subr.mxu0 0.0
    %1449 = vmatpush1.msra.mxu0 0.0
    %1450 = vmatprep.subr.mxu0 0.0
    %1451 = vmatpush1.msra.mxu0 0.0
    %1452 = vmatprep.subr.mxu0 0.0
    %1453 = vmatpush1.msra.mxu0 0.0
    %1454 = vmatprep.subr.mxu0 0.0
    %1455 = vmatpush1.msra.mxu0 0.0
    %1456 = vmatprep.subr.mxu0 0.0
    %1457 = vmatpush1.msra.mxu0 0.0
    %1458 = vmatprep.subr.mxu0 0.0
    %1459 = vmatpush1.msra.mxu0 0.0
    %1460 = vmatprep.subr.mxu0 0.0
    %1461 = vmatpush1.msra.mxu0 0.0
    %1462 = vmatprep.subr.mxu0 0.0
    %1463 = vmatpush1.msra.mxu0 0.0
    %1464 = vmatprep.mubr.f32.mxu0 0.0
    %1465 = vmatmul.mubr.f32.gmra.mrb[0].mxu0 %v1398
    %v1466 = vpop.f32.mrb[0].mxu0
    %v1467 = vadd.f32 %v1342, %v1466
    %v1468 = vpop.f32.mrb[0].mxu0
    %1469 = vdwg.mxu0
    %v1470 = vadd.f32 %v1467, %v189
    %v1471 = vxor.u32 %v1470, 2147483648
    %v1472 = vmul.f32 %v1471, 1.442695
    %v1473 = vpow.pop %v1472
    %v1474 = vadd.f32 %v1473, 1.0
    %v1475 = vrcp.pop %v1474
    %v1476 = vmul.f32 1.0, %v1475
    %v1477 = vtanh.pop %v1470
    %v1478 = vsel %vm193, %v1476, %v1477
    %v1479 = vmul.f32 %v1478, %v1257
    %1481 = vrot.lane.b32.xlu0 %v1478, 32
    %v1482 = vpop.permute.xlu0 %1481
    %v1484 = vmul.f32 %v1478, %v1482
    %1486 = vrot.lane.b32.xlu0 %v1484, 32
    %v1487 = vpop.permute.xlu0 %1486
    %v1489 = vadd.f32 %v1479, %v1487
    %v1490 = vtanh.pop %v1489
    %1492 = vrot.lane.b32.xlu0 %v1490, 32
    %v1493 = vpop.permute.xlu0 %1492
    %v1495 = vmul.f32 %v1478, %v1493
    %1498 = vrot.lane.b32.xlu0 %v1495, 96
    %v1499 = vpop.permute.xlu0 %1498
    %v1501 = vsel %vm240, %v1397, %v1499
    %v1503 = vsel %vm344, %v1501, 0
    %1505 = vmatprep.subr.mxu0 %v165
    %1506 = vmatpush1.msra.mxu0 %v164
    %1507 = vmatprep.subr.mxu0 %v167
    %1508 = vmatpush1.msra.mxu0 %v166
    %1509 = vmatprep.subr.mxu0 %v169
    %1510 = vmatpush1.msra.mxu0 %v168
    %1511 = vmatprep.subr.mxu0 %v171
    %1512 = vmatpush1.msra.mxu0 %v170
    %1513 = vmatprep.subr.mxu0 %v173
    %1514 = vmatpush1.msra.mxu0 %v172
    %1515 = vmatprep.subr.mxu0 %v175
    %1516 = vmatpush1.msra.mxu0 %v174
    %1517 = vmatprep.subr.mxu0 %v177
    %1518 = vmatpush1.msra.mxu0 %v176
    %1519 = vmatprep.subr.mxu0 %v179
    %1520 = vmatpush1.msra.mxu0 %v178
    %1521 = vmatprep.subr.mxu0 0.0
    %1522 = vmatpush1.msra.mxu0 0.0
    %1523 = vmatprep.subr.mxu0 0.0
    %1524 = vmatpush1.msra.mxu0 0.0
    %1525 = vmatprep.subr.mxu0 0.0
    %1526 = vmatpush1.msra.mxu0 0.0
    %1527 = vmatprep.subr.mxu0 0.0
    %1528 = vmatpush1.msra.mxu0 0.0
    %1529 = vmatprep.subr.mxu0 0.0
    %1530 = vmatpush1.msra.mxu0 0.0
    %1531 = vmatprep.subr.mxu0 0.0
    %1532 = vmatpush1.msra.mxu0 0.0
    %1533 = vmatprep.subr.mxu0 0.0
    %1534 = vmatpush1.msra.mxu0 0.0
    %1535 = vmatprep.subr.mxu0 0.0
    %1536 = vmatpush1.msra.mxu0 0.0
    %1537 = vmatprep.subr.mxu0 0.0
    %1538 = vmatpush1.msra.mxu0 0.0
    %1539 = vmatprep.subr.mxu0 0.0
    %1540 = vmatpush1.msra.mxu0 0.0
    %1541 = vmatprep.subr.mxu0 0.0
    %1542 = vmatpush1.msra.mxu0 0.0
    %1543 = vmatprep.subr.mxu0 0.0
    %1544 = vmatpush1.msra.mxu0 0.0
    %1545 = vmatprep.subr.mxu0 0.0
    %1546 = vmatpush1.msra.mxu0 0.0
    %1547 = vmatprep.subr.mxu0 0.0
    %1548 = vmatpush1.msra.mxu0 0.0
    %1549 = vmatprep.subr.mxu0 0.0
    %1550 = vmatpush1.msra.mxu0 0.0
    %1551 = vmatprep.subr.mxu0 0.0
    %1552 = vmatpush1.msra.mxu0 0.0
    %1553 = vmatprep.subr.mxu0 0.0
    %1554 = vmatpush1.msra.mxu0 0.0
    %1555 = vmatprep.subr.mxu0 0.0
    %1556 = vmatpush1.msra.mxu0 0.0
    %1557 = vmatprep.subr.mxu0 0.0
    %1558 = vmatpush1.msra.mxu0 0.0
    %1559 = vmatprep.subr.mxu0 0.0
    %1560 = vmatpush1.msra.mxu0 0.0
    %1561 = vmatprep.subr.mxu0 0.0
    %1562 = vmatpush1.msra.mxu0 0.0
    %1563 = vmatprep.subr.mxu0 0.0
    %1564 = vmatpush1.msra.mxu0 0.0
    %1565 = vmatprep.subr.mxu0 0.0
    %1566 = vmatpush1.msra.mxu0 0.0
    %1567 = vmatprep.subr.mxu0 0.0
    %1568 = vmatpush1.msra.mxu0 0.0
    %1569 = vmatprep.mubr.f32.mxu0 0.0
    %1570 = vmatmul.mubr.f32.gmra.mrb[0].mxu0 %v1503
    %v1571 = vpop.f32.mrb[0].mxu0
    %v1572 = vadd.f32 0.0, %v1571
    %v1573 = vpop.f32.mrb[0].mxu0
    %v1574 = vadd.f32 0.0, %v1573
    %1575 = vdwg.mxu0
    %v1577 = vrot.slane %v1572, 2
    %v1578 = vrot.slane %v1572, 3
    %v1581 = vadd.f32 %v156, %v1577
    %v1582 = vadd.f32 %v161, %v1578
    %v1583 = vxor.u32 %v1581, 2147483648
    %v1584 = vxor.u32 %v1582, 2147483648
    %v1585 = vmul.f32 %v1583, 1.442695
    %v1586 = vpow.pop %v1585
    %v1587 = vmul.f32 %v1584, 1.442695
    %v1588 = vpow.pop %v1587
    %v1589 = vadd.f32 %v1586, 1.0
    %v1590 = vadd.f32 %v1588, 1.0
    %v1591 = vrcp.pop %v1589
    %v1592 = vmul.f32 1.0, %v1591
    %v1593 = vrcp.pop %v1590
    %v1594 = vmul.f32 1.0, %v1593
    %v1595 = vtanh.pop %v1581
    %v1596 = vtanh.pop %v1582
    %v1599 = vrot.slane %v1592, 6
    %v1600 = vrot.slane %v1594, 5
    %v1601 = vsel %vm211, %v1600, %v1599
    %v1605 = vrot.slane %v1595, 6
    %v1606 = vrot.slane %v1596, 5
    %v1607 = vsel %vm211, %v1606, %v1605
    %v1609 = vsel %vm193, %v1601, %v1607
    %v1610 = vmul.f32 %v1609, %v1388
    %1612 = vrot.lane.b32.xlu0 %v1609, 32
    %v1613 = vpop.permute.xlu0 %1612
    %v1615 = vmul.f32 %v1609, %v1613
    %1617 = vrot.lane.b32.xlu0 %v1615, 32
    %v1618 = vpop.permute.xlu0 %1617
    %v1620 = vadd.f32 %v1610, %v1618
    %v1621 = vtanh.pop %v1620
    %1623 = vrot.lane.b32.xlu0 %v1621, 32
    %v1624 = vpop.permute.xlu0 %1623
    %v1626 = vmul.f32 %v1609, %v1624
    %1628 = vrot.lane.b32.xlu0 %v1626, 64
    %v1629 = vpop.permute.xlu0 %1628
    %v1630 = vsel %vm240, %v1629, 0
    %1632 = vmatprep.subr.mxu0 0.0
    %1633 = vmatpush1.msra.mxu0 %v180
    %1634 = vmatprep.subr.mxu0 0.0
    %1635 = vmatpush1.msra.mxu0 %v181
    %1636 = vmatprep.subr.mxu0 0.0
    %1637 = vmatpush1.msra.mxu0 %v182
    %1638 = vmatprep.subr.mxu0 0.0
    %1639 = vmatpush1.msra.mxu0 %v183
    %1640 = vmatprep.subr.mxu0 0.0
    %1641 = vmatpush1.msra.mxu0 0.0
    %1642 = vmatprep.subr.mxu0 0.0
    %1643 = vmatpush1.msra.mxu0 0.0
    %1644 = vmatprep.subr.mxu0 0.0
    %1645 = vmatpush1.msra.mxu0 0.0
    %1646 = vmatprep.subr.mxu0 0.0
    %1647 = vmatpush1.msra.mxu0 0.0
    %1648 = vmatprep.subr.mxu0 0.0
    %1649 = vmatpush1.msra.mxu0 0.0
    %1650 = vmatprep.subr.mxu0 0.0
    %1651 = vmatpush1.msra.mxu0 0.0
    %1652 = vmatprep.subr.mxu0 0.0
    %1653 = vmatpush1.msra.mxu0 0.0
    %1654 = vmatprep.subr.mxu0 0.0
    %1655 = vmatpush1.msra.mxu0 0.0
    %1656 = vmatprep.subr.mxu0 0.0
    %1657 = vmatpush1.msra.mxu0 0.0
    %1658 = vmatprep.subr.mxu0 0.0
    %1659 = vmatpush1.msra.mxu0 0.0
    %1660 = vmatprep.subr.mxu0 0.0
    %1661 = vmatpush1.msra.mxu0 0.0
    %1662 = vmatprep.subr.mxu0 0.0
    %1663 = vmatpush1.msra.mxu0 0.0
    %1664 = vmatprep.subr.mxu0 0.0
    %1665 = vmatpush1.msra.mxu0 0.0
    %1666 = vmatprep.subr.mxu0 0.0
    %1667 = vmatpush1.msra.mxu0 0.0
    %1668 = vmatprep.subr.mxu0 0.0
    %1669 = vmatpush1.msra.mxu0 0.0
    %1670 = vmatprep.subr.mxu0 0.0
    %1671 = vmatpush1.msra.mxu0 0.0
    %1672 = vmatprep.subr.mxu0 0.0
    %1673 = vmatpush1.msra.mxu0 0.0
    %1674 = vmatprep.subr.mxu0 0.0
    %1675 = vmatpush1.msra.mxu0 0.0
    %1676 = vmatprep.subr.mxu0 0.0
    %1677 = vmatpush1.msra.mxu0 0.0
    %1678 = vmatprep.subr.mxu0 0.0
    %1679 = vmatpush1.msra.mxu0 0.0
    %1680 = vmatprep.subr.mxu0 0.0
    %1681 = vmatpush1.msra.mxu0 0.0
    %1682 = vmatprep.subr.mxu0 0.0
    %1683 = vmatpush1.msra.mxu0 0.0
    %1684 = vmatprep.subr.mxu0 0.0
    %1685 = vmatpush1.msra.mxu0 0.0
    %1686 = vmatprep.subr.mxu0 0.0
    %1687 = vmatpush1.msra.mxu0 0.0
    %1688 = vmatprep.subr.mxu0 0.0
    %1689 = vmatpush1.msra.mxu0 0.0
    %1690 = vmatprep.subr.mxu0 0.0
    %1691 = vmatpush1.msra.mxu0 0.0
    %1692 = vmatprep.subr.mxu0 0.0
    %1693 = vmatpush1.msra.mxu0 0.0
    %1694 = vmatprep.subr.mxu0 0.0
    %1695 = vmatpush1.msra.mxu0 0.0
    %1696 = vmatprep.mubr.f32.mxu0 0.0
    %1697 = vmatmul.mubr.f32.gmra.mrb[0].mxu0 %v1630
    %v1698 = vpop.f32.mrb[0].mxu0
    %v1699 = vadd.f32 %v1574, %v1698
    %v1700 = vpop.f32.mrb[0].mxu0
    %1701 = vdwg.mxu0
    %v1702 = vadd.f32 %v1699, %v189
    %v1703 = vxor.u32 %v1702, 2147483648
    %v1704 = vmul.f32 %v1703, 1.442695
    %v1705 = vpow.pop %v1704
    %v1706 = vadd.f32 %v1705, 1.0
    %v1707 = vrcp.pop %v1706
    %v1708 = vmul.f32 1.0, %v1707
    %v1709 = vtanh.pop %v1702
    %v1710 = vsel %vm193, %v1708, %v1709
    %v1711 = vmul.f32 %v1710, %v1489
    %1713 = vrot.lane.b32.xlu0 %v1710, 32
    %v1714 = vpop.permute.xlu0 %1713
    %v1716 = vmul.f32 %v1710, %v1714
    %1718 = vrot.lane.b32.xlu0 %v1716, 32
    %v1719 = vpop.permute.xlu0 %1718
    %v1721 = vadd.f32 %v1711, %v1719
    %v1722 = vtanh.pop %v1721
    %1724 = vrot.lane.b32.xlu0 %v1722, 32
    %v1725 = vpop.permute.xlu0 %1724
    %v1727 = vmul.f32 %v1710, %v1725
    %1730 = vrot.lane.b32.xlu0 %v1727, 96
    %v1731 = vpop.permute.xlu0 %1730
    %v1733 = vsel %vm240, %v1629, %v1731
    %v1735 = vsel %vm344, %v1733, 0
    %1737 = vmatprep.subr.mxu0 %v165
    %1738 = vmatpush1.msra.mxu0 %v164
    %1739 = vmatprep.subr.mxu0 %v167
    %1740 = vmatpush1.msra.mxu0 %v166
    %1741 = vmatprep.subr.mxu0 %v169
    %1742 = vmatpush1.msra.mxu0 %v168
    %1743 = vmatprep.subr.mxu0 %v171
    %1744 = vmatpush1.msra.mxu0 %v170
    %1745 = vmatprep.subr.mxu0 %v173
    %1746 = vmatpush1.msra.mxu0 %v172
    %1747 = vmatprep.subr.mxu0 %v175
    %1748 = vmatpush1.msra.mxu0 %v174
    %1749 = vmatprep.subr.mxu0 %v177
    %1750 = vmatpush1.msra.mxu0 %v176
    %1751 = vmatprep.subr.mxu0 %v179
    %1752 = vmatpush1.msra.mxu0 %v178
    %1753 = vmatprep.subr.mxu0 0.0
    %1754 = vmatpush1.msra.mxu0 0.0
    %1755 = vmatprep.subr.mxu0 0.0
    %1756 = vmatpush1.msra.mxu0 0.0
    %1757 = vmatprep.subr.mxu0 0.0
    %1758 = vmatpush1.msra.mxu0 0.0
    %1759 = vmatprep.subr.mxu0 0.0
    %1760 = vmatpush1.msra.mxu0 0.0
    %1761 = vmatprep.subr.mxu0 0.0
    %1762 = vmatpush1.msra.mxu0 0.0
    %1763 = vmatprep.subr.mxu0 0.0
    %1764 = vmatpush1.msra.mxu0 0.0
    %1765 = vmatprep.subr.mxu0 0.0
    %1766 = vmatpush1.msra.mxu0 0.0
    %1767 = vmatprep.subr.mxu0 0.0
    %1768 = vmatpush1.msra.mxu0 0.0
    %1769 = vmatprep.subr.mxu0 0.0
    %1770 = vmatpush1.msra.mxu0 0.0
    %1771 = vmatprep.subr.mxu0 0.0
    %1772 = vmatpush1.msra.mxu0 0.0
    %1773 = vmatprep.subr.mxu0 0.0
    %1774 = vmatpush1.msra.mxu0 0.0
    %1775 = vmatprep.subr.mxu0 0.0
    %1776 = vmatpush1.msra.mxu0 0.0
    %1777 = vmatprep.subr.mxu0 0.0
    %1778 = vmatpush1.msra.mxu0 0.0
    %1779 = vmatprep.subr.mxu0 0.0
    %1780 = vmatpush1.msra.mxu0 0.0
    %1781 = vmatprep.subr.mxu0 0.0
    %1782 = vmatpush1.msra.mxu0 0.0
    %1783 = vmatprep.subr.mxu0 0.0
    %1784 = vmatpush1.msra.mxu0 0.0
    %1785 = vmatprep.subr.mxu0 0.0
    %1786 = vmatpush1.msra.mxu0 0.0
    %1787 = vmatprep.subr.mxu0 0.0
    %1788 = vmatpush1.msra.mxu0 0.0
    %1789 = vmatprep.subr.mxu0 0.0
    %1790 = vmatpush1.msra.mxu0 0.0
    %1791 = vmatprep.subr.mxu0 0.0
    %1792 = vmatpush1.msra.mxu0 0.0
    %1793 = vmatprep.subr.mxu0 0.0
    %1794 = vmatpush1.msra.mxu0 0.0
    %1795 = vmatprep.subr.mxu0 0.0
    %1796 = vmatpush1.msra.mxu0 0.0
    %1797 = vmatprep.subr.mxu0 0.0
    %1798 = vmatpush1.msra.mxu0 0.0
    %1799 = vmatprep.subr.mxu0 0.0
    %1800 = vmatpush1.msra.mxu0 0.0
    %1801 = vmatprep.mubr.f32.mxu0 0.0
    %1802 = vmatmul.mubr.f32.gmra.mrb[0].mxu0 %v1735
    %v1803 = vpop.f32.mrb[0].mxu0
    %v1804 = vadd.f32 0.0, %v1803
    %v1805 = vpop.f32.mrb[0].mxu0
    %v1806 = vadd.f32 0.0, %v1805
    %1807 = vdwg.mxu0
    %v1809 = vrot.slane %v1804, 1
    %v1810 = vrot.slane %v1804, 2
    %v1813 = vadd.f32 %v156, %v1809
    %v1814 = vadd.f32 %v161, %v1810
    %v1815 = vxor.u32 %v1813, 2147483648
    %v1816 = vxor.u32 %v1814, 2147483648
    %v1817 = vmul.f32 %v1815, 1.442695
    %v1818 = vpow.pop %v1817
    %v1819 = vmul.f32 %v1816, 1.442695
    %v1820 = vpow.pop %v1819
    %v1821 = vadd.f32 %v1818, 1.0
    %v1822 = vadd.f32 %v1820, 1.0
    %v1823 = vrcp.pop %v1821
    %v1824 = vmul.f32 1.0, %v1823
    %v1825 = vrcp.pop %v1822
    %v1826 = vmul.f32 1.0, %v1825
    %v1827 = vtanh.pop %v1813
    %v1828 = vtanh.pop %v1814
    %v1831 = vrot.slane %v1824, 7
    %v1832 = vrot.slane %v1826, 6
    %v1833 = vsel %vm211, %v1832, %v1831
    %v1837 = vrot.slane %v1827, 7
    %v1838 = vrot.slane %v1828, 6
    %v1839 = vsel %vm211, %v1838, %v1837
    %v1841 = vsel %vm193, %v1833, %v1839
    %v1842 = vmul.f32 %v1841, %v1620
    %1844 = vrot.lane.b32.xlu0 %v1841, 32
    %v1845 = vpop.permute.xlu0 %1844
    %v1847 = vmul.f32 %v1841, %v1845
    %1849 = vrot.lane.b32.xlu0 %v1847, 32
    %v1850 = vpop.permute.xlu0 %1849
    %v1852 = vadd.f32 %v1842, %v1850
    %v1853 = vtanh.pop %v1852
    %1855 = vrot.lane.b32.xlu0 %v1853, 32
    %v1856 = vpop.permute.xlu0 %1855
    %v1858 = vmul.f32 %v1841, %v1856
    %1860 = vrot.lane.b32.xlu0 %v1858, 64
    %v1861 = vpop.permute.xlu0 %1860
    %v1862 = vsel %vm240, %v1861, 0
    %1864 = vmatprep.subr.mxu0 0.0
    %1865 = vmatpush1.msra.mxu0 %v180
    %1866 = vmatprep.subr.mxu0 0.0
    %1867 = vmatpush1.msra.mxu0 %v181
    %1868 = vmatprep.subr.mxu0 0.0
    %1869 = vmatpush1.msra.mxu0 %v182
    %1870 = vmatprep.subr.mxu0 0.0
    %1871 = vmatpush1.msra.mxu0 %v183
    %1872 = vmatprep.subr.mxu0 0.0
    %1873 = vmatpush1.msra.mxu0 0.0
    %1874 = vmatprep.subr.mxu0 0.0
    %1875 = vmatpush1.msra.mxu0 0.0
    %1876 = vmatprep.subr.mxu0 0.0
    %1877 = vmatpush1.msra.mxu0 0.0
    %1878 = vmatprep.subr.mxu0 0.0
    %1879 = vmatpush1.msra.mxu0 0.0
    %1880 = vmatprep.subr.mxu0 0.0
    %1881 = vmatpush1.msra.mxu0 0.0
    %1882 = vmatprep.subr.mxu0 0.0
    %1883 = vmatpush1.msra.mxu0 0.0
    %1884 = vmatprep.subr.mxu0 0.0
    %1885 = vmatpush1.msra.mxu0 0.0
    %1886 = vmatprep.subr.mxu0 0.0
    %1887 = vmatpush1.msra.mxu0 0.0
    %1888 = vmatprep.subr.mxu0 0.0
    %1889 = vmatpush1.msra.mxu0 0.0
    %1890 = vmatprep.subr.mxu0 0.0
    %1891 = vmatpush1.msra.mxu0 0.0
    %1892 = vmatprep.subr.mxu0 0.0
    %1893 = vmatpush1.msra.mxu0 0.0
    %1894 = vmatprep.subr.mxu0 0.0
    %1895 = vmatpush1.msra.mxu0 0.0
    %1896 = vmatprep.subr.mxu0 0.0
    %1897 = vmatpush1.msra.mxu0 0.0
    %1898 = vmatprep.subr.mxu0 0.0
    %1899 = vmatpush1.msra.mxu0 0.0
    %1900 = vmatprep.subr.mxu0 0.0
    %1901 = vmatpush1.msra.mxu0 0.0
    %1902 = vmatprep.subr.mxu0 0.0
    %1903 = vmatpush1.msra.mxu0 0.0
    %1904 = vmatprep.subr.mxu0 0.0
    %1905 = vmatpush1.msra.mxu0 0.0
    %1906 = vmatprep.subr.mxu0 0.0
    %1907 = vmatpush1.msra.mxu0 0.0
    %1908 = vmatprep.subr.mxu0 0.0
    %1909 = vmatpush1.msra.mxu0 0.0
    %1910 = vmatprep.subr.mxu0 0.0
    %1911 = vmatpush1.msra.mxu0 0.0
    %1912 = vmatprep.subr.mxu0 0.0
    %1913 = vmatpush1.msra.mxu0 0.0
    %1914 = vmatprep.subr.mxu0 0.0
    %1915 = vmatpush1.msra.mxu0 0.0
    %1916 = vmatprep.subr.mxu0 0.0
    %1917 = vmatpush1.msra.mxu0 0.0
    %1918 = vmatprep.subr.mxu0 0.0
    %1919 = vmatpush1.msra.mxu0 0.0
    %1920 = vmatprep.subr.mxu0 0.0
    %1921 = vmatpush1.msra.mxu0 0.0
    %1922 = vmatprep.subr.mxu0 0.0
    %1923 = vmatpush1.msra.mxu0 0.0
    %1924 = vmatprep.subr.mxu0 0.0
    %1925 = vmatpush1.msra.mxu0 0.0
    %1926 = vmatprep.subr.mxu0 0.0
    %1927 = vmatpush1.msra.mxu0 0.0
    %1928 = vmatprep.mubr.f32.mxu0 0.0
    %1929 = vmatmul.mubr.f32.gmra.mrb[0].mxu0 %v1862
    %v1930 = vpop.f32.mrb[0].mxu0
    %v1931 = vadd.f32 %v1806, %v1930
    %v1932 = vpop.f32.mrb[0].mxu0
    %1933 = vdwg.mxu0
    %v1934 = vadd.f32 %v1931, %v189
    %v1935 = vxor.u32 %v1934, 2147483648
    %v1936 = vmul.f32 %v1935, 1.442695
    %v1937 = vpow.pop %v1936
    %v1938 = vadd.f32 %v1937, 1.0
    %v1939 = vrcp.pop %v1938
    %v1940 = vmul.f32 1.0, %v1939
    %v1941 = vtanh.pop %v1934
    %v1942 = vsel %vm193, %v1940, %v1941
    %v1943 = vmul.f32 %v1942, %v1721
    %1945 = vrot.lane.b32.xlu0 %v1942, 32
    %v1946 = vpop.permute.xlu0 %1945
    %v1948 = vmul.f32 %v1942, %v1946
    %1950 = vrot.lane.b32.xlu0 %v1948, 32
    %v1951 = vpop.permute.xlu0 %1950
    %v1953 = vadd.f32 %v1943, %v1951
    %v1954 = vtanh.pop %v1953
    %1956 = vrot.lane.b32.xlu0 %v1954, 32
    %v1957 = vpop.permute.xlu0 %1956
    %v1959 = vmul.f32 %v1942, %v1957
    %v1960 = vtanh.pop %v1959
    %v1961 = vld [vmem:[#allocation4] sm:$0xff]
    %v1962 = vld [vmem:[#allocation4 + $0x8] sm:$0xff]
    %v1963 = vld [vmem:[#allocation4 + $0x10] sm:$0xff]
    %v1964 = vld [vmem:[#allocation4 + $0x18] sm:$0xff]
    %v1965 = vld [vmem:[#allocation6] sm:$0x1]
    %v1967 = vlaneseq
    %v1968 = vshrl.u32 %v1967, 7
    %v1969 = vsub.s32 0, %v1968
    %v1970 = vrot.slane %v1965, %v1969
    %1973 = vrot.lane.b32.xlu0 %v1960, 64
    %v1974 = vpop.permute.xlu0 %1973
    %v1975 = vsel %vm240, %v1974, 0
    %1977 = vmatprep.subr.mxu0 0.0
    %1978 = vmatpush1.msra.mxu0 %v1961
    %1979 = vmatprep.subr.mxu0 0.0
    %1980 = vmatpush1.msra.mxu0 %v1962
    %1981 = vmatprep.subr.mxu0 0.0
    %1982 = vmatpush1.msra.mxu0 %v1963
    %1983 = vmatprep.subr.mxu0 0.0
    %1984 = vmatpush1.msra.mxu0 %v1964
    %1985 = vmatprep.subr.mxu0 0.0
    %1986 = vmatpush1.msra.mxu0 0.0
    %1987 = vmatprep.subr.mxu0 0.0
    %1988 = vmatpush1.msra.mxu0 0.0
    %1989 = vmatprep.subr.mxu0 0.0
    %1990 = vmatpush1.msra.mxu0 0.0
    %1991 = vmatprep.subr.mxu0 0.0
    %1992 = vmatpush1.msra.mxu0 0.0
    %1993 = vmatprep.subr.mxu0 0.0
    %1994 = vmatpush1.msra.mxu0 0.0
    %1995 = vmatprep.subr.mxu0 0.0
    %1996 = vmatpush1.msra.mxu0 0.0
    %1997 = vmatprep.subr.mxu0 0.0
    %1998 = vmatpush1.msra.mxu0 0.0
    %1999 = vmatprep.subr.mxu0 0.0
    %2000 = vmatpush1.msra.mxu0 0.0
    %2001 = vmatprep.subr.mxu0 0.0
    %2002 = vmatpush1.msra.mxu0 0.0
    %2003 = vmatprep.subr.mxu0 0.0
    %2004 = vmatpush1.msra.mxu0 0.0
    %2005 = vmatprep.subr.mxu0 0.0
    %2006 = vmatpush1.msra.mxu0 0.0
    %2007 = vmatprep.subr.mxu0 0.0
    %2008 = vmatpush1.msra.mxu0 0.0
    %2009 = vmatprep.subr.mxu0 0.0
    %2010 = vmatpush1.msra.mxu0 0.0
    %2011 = vmatprep.subr.mxu0 0.0
    %2012 = vmatpush1.msra.mxu0 0.0
    %2013 = vmatprep.subr.mxu0 0.0
    %2014 = vmatpush1.msra.mxu0 0.0
    %2015 = vmatprep.subr.mxu0 0.0
    %2016 = vmatpush1.msra.mxu0 0.0
    %2017 = vmatprep.subr.mxu0 0.0
    %2018 = vmatpush1.msra.mxu0 0.0
    %2019 = vmatprep.subr.mxu0 0.0
    %2020 = vmatpush1.msra.mxu0 0.0
    %2021 = vmatprep.subr.mxu0 0.0
    %2022 = vmatpush1.msra.mxu0 0.0
    %2023 = vmatprep.subr.mxu0 0.0
    %2024 = vmatpush1.msra.mxu0 0.0
    %2025 = vmatprep.subr.mxu0 0.0
    %2026 = vmatpush1.msra.mxu0 0.0
    %2027 = vmatprep.subr.mxu0 0.0
    %2028 = vmatpush1.msra.mxu0 0.0
    %2029 = vmatprep.subr.mxu0 0.0
    %2030 = vmatpush1.msra.mxu0 0.0
    %2031 = vmatprep.subr.mxu0 0.0
    %2032 = vmatpush1.msra.mxu0 0.0
    %2033 = vmatprep.subr.mxu0 0.0
    %2034 = vmatpush1.msra.mxu0 0.0
    %2035 = vmatprep.subr.mxu0 0.0
    %2036 = vmatpush1.msra.mxu0 0.0
    %2037 = vmatprep.subr.mxu0 0.0
    %2038 = vmatpush1.msra.mxu0 0.0
    %2039 = vmatprep.subr.mxu0 0.0
    %2040 = vmatpush1.msra.mxu0 0.0
    %2041 = vmatprep.mubr.f32.mxu0 0.0
    %2042 = vmatmul.mubr.f32.gmra.mrb[0].mxu0 %v1975
    %v2043 = vpop.f32.mrb[0].mxu0
    %v2044 = vadd.f32 %v1970, %v2043
    %v2045 = vpop.f32.mrb[0].mxu0
    %2046 = vdwg.mxu0
    %vm2047 = vcmp.ge.s32.totalorder %v192, 1
    %vm2048 = vcmp.lt.s32.totalorder %v192, 5
    %vm2049 = vmand %vm2047, %vm2048
    %v2050 = vxor.u32 %v2044, 2147483648
    %v2051 = vmul.f32 %v2050, 1.442695
    %v2052 = vpow.pop %v2051
    %v2053 = vadd.f32 %v2052, 1.0
    %v2054 = vrcp.pop %v2053
    %v2055 = vmul.f32 1.0, %v2054
    %v2056 = vsel %vm2049, %v2055, %v2044
    %2057 = vst [vmem:[%s8] sm:$0x3] %v2056
    // Predicated region
    $region46: #{policy_forward.1} parent=1 // pred_check
      _
    $region47: #{policy_forward.1} parent=1 // pred_check_branch
      %2059 = sbr.rel (0) target = $region49
    $region48: #{policy_forward.1} parent=1 // pred_region
      _
    $region49: #{policy_forward.1} parent=1 // pred_fallthru
      _
    // Predicated region
    $region50: #{policy_forward.1} parent=1 // pred_check
      _
    $region51: #{policy_forward.1} parent=1 // pred_check_branch
      %2061 = sbr.rel (0) target = $region53
    $region52: #{policy_forward.1} parent=1 // pred_region
      _
    $region53: #{policy_forward.1} parent=1 // pred_fallthru
      _
    %2062 = vsyncpa [#allocation3], 1
    %2063 = vsyncpa [#allocation5], 1

</llo_original>
